<compile_context>
chip_gen: v5e
topology: v5e:2x2
jax: 0.10.0
libtpu: 0.0.40
codegen_flags: <defaults>
</compile_context>

<pallas_src>
import math
from types import SimpleNamespace

import jax
import jax.numpy as jnp
from jax import lax
from jax.experimental import pallas as pl
from jax.experimental.pallas import tpu as pltpu

# ----------------------------- synthetic Gemma config -----------------------
VOCAB = 128
D_MODEL = 32
N_HEADS = 2
HEAD_DIM = D_MODEL // N_HEADS
D_FF = 64
N_LAYERS = 2
NEG_INF = -1e9

DEFAULT_INSTRUCTIONS = [
    "Given a user prompt, generate an 'Enhanced prompt' that provides detailed visual descriptions suitable for image generation. Evaluate the level of detail in the user prompt:",
    '- If the prompt is simple, focus on adding specifics about colors, shapes, sizes, textures, and spatial relationships to create vivid and concrete scenes.',
    '- If the prompt is already detailed, refine and enhance the existing details slightly without overcomplicating.',
    'Here are examples of how to transform or refine prompts:',
    '- User Prompt: A cat sleeping -> Enhanced: A small, fluffy white cat curled up in a round shape, sleeping peacefully on a warm sunny windowsill, surrounded by pots of blooming red flowers.',
    '- User Prompt: A busy city street -> Enhanced: A bustling city street scene at dusk, featuring glowing street lamps, a diverse crowd of people in colorful clothing, and a double-decker bus passing by towering glass skyscrapers.',
    'Please generate only the enhanced description for the prompt below and avoid including any additional commentary or evaluations:',
    'User Prompt: ',
]


# ----------------------------- Pallas kernel ---------------------------------
def _rms_norm(x, w):
    # Gemma RMSNorm:  x * rsqrt(mean(x^2) + eps) * (1 + w)   -- f32 math
    var = jnp.mean(x * x, axis=-1, keepdims=True)
    return x * lax.rsqrt(var + 1e-6) * (1.0 + w)


def gemma_fused_kernel(x_ref, mask_ref, n1_ref, wq_ref, wk_ref, wv_ref, wo_ref,
                       n2_ref, wg_ref, wu_ref, wd_ref, wf_ref, o_ref, acc_ref):
    """One (batch, layer) grid step of the fused Gemma stack.

    grid = (B, L); B is 'parallel', L is 'arbitrary' (innermost).  The hidden
    state stays resident in the VMEM scratch `acc_ref` for all L layers of a
    batch element; the output block is written once, at the last layer, after
    the final RMSNorm.
    """
    layer = pl.program_id(1)
    n_layers = pl.num_programs(1)
    S, D = acc_ref.shape

    @pl.when(layer == 0)
    def _():
        acc_ref[...] = x_ref[0]          # load embeddings into the accumulator

    x = acc_ref[...]                      # (S, D) f32

    # --- causal + key-padding additive bias, built in-kernel (f32) ----------
    row = lax.broadcasted_iota(jnp.int32, (S, S), 0)
    col = lax.broadcasted_iota(jnp.int32, (S, S), 1)
    key_ok = mask_ref[0] > 0.5                              # (1, S)
    allowed = jnp.logical_and(col <= row, key_ok)           # (S, S)
    bias = jnp.where(allowed, 0.0, NEG_INF)                 # (S, S) f32

    # --- attention -----------------------------------------------------------
    # TODO(synk): RoPE position embedding of real Gemma omitted in this synthetic model.
    h = _rms_norm(x, n1_ref[0])                             # f32
    hb = h.astype(jnp.bfloat16)
    # 1/sqrt(HEAD_DIM) is pre-folded into wq host-side.
    q = jnp.dot(hb, wq_ref[0], preferred_element_type=jnp.float32)   # (S, D)
    k = jnp.dot(hb, wk_ref[0], preferred_element_type=jnp.float32)
    v = jnp.dot(hb, wv_ref[0], preferred_element_type=jnp.float32)

    def split_heads(t):                                     # (S, D) -> (H, S, HEAD_DIM)
        return jnp.stack(
            [t[:, i * HEAD_DIM:(i + 1) * HEAD_DIM] for i in range(N_HEADS)],
            axis=0).astype(jnp.bfloat16)

    q3, k3, v3 = split_heads(q), split_heads(k), split_heads(v)

    # Batched (head-dim leading) score / softmax / context; f32 accumulation.
    s = jnp.einsum('hqd,hkd->hqk', q3, k3,
                   preferred_element_type=jnp.float32)      # (H, S, S)
    s = s + bias[None]
    s = s - jnp.max(s, axis=-1, keepdims=True)
    p = jnp.exp(s)
    p = p * pl.reciprocal(jnp.sum(p, axis=-1, keepdims=True), approx=True)
    ctx3 = jnp.einsum('hqk,hkd->hqd', p.astype(jnp.bfloat16), v3,
                      preferred_element_type=jnp.float32)   # (H, S, HEAD_DIM)
    ctx = jnp.concatenate([ctx3[i] for i in range(N_HEADS)], axis=-1)  # (S, D)
    # Single output projection with the full wo.
    x = x + jnp.dot(ctx.astype(jnp.bfloat16), wo_ref[0],
                    preferred_element_type=jnp.float32)

    # --- GeGLU MLP -----------------------------------------------------------
    h2 = _rms_norm(x, n2_ref[0])
    h2b = h2.astype(jnp.bfloat16)
    g = jax.nn.gelu(jnp.dot(h2b, wg_ref[0], preferred_element_type=jnp.float32),
                    approximate=True)
    u = jnp.dot(h2b, wu_ref[0], preferred_element_type=jnp.float32)
    x = x + jnp.dot((g * u).astype(jnp.bfloat16), wd_ref[0],
                    preferred_element_type=jnp.float32)

    acc_ref[...] = x

    @pl.when(layer == n_layers - 1)
    def _():
        o_ref[0] = _rms_norm(x, wf_ref[...])                # final RMSNorm fused


# ----------------------------- pallas_call wrapper ---------------------------
def prepare_gemma_params(params):
    """Stack per-layer weights along a leading L axis for the fused kernel,
    fold the attention scale into wq, and cast matmul weights to bf16
    (RMSNorm scales stay f32)."""
    layers = params['layers']
    L = len(layers)
    scale = 1.0 / math.sqrt(HEAD_DIM)

    def stack(name):
        return jnp.stack([lp[name] for lp in layers], axis=0)

    return {
        'embed': params['embed'],
        'n1': stack('n1').reshape(L, 1, D_MODEL),
        'n2': stack('n2').reshape(L, 1, D_MODEL),
        'wq': (stack('wq') * scale).astype(jnp.bfloat16),
        'wk': stack('wk').astype(jnp.bfloat16),
        'wv': stack('wv').astype(jnp.bfloat16),
        'wo': stack('wo').astype(jnp.bfloat16),
        'wg': stack('wg').astype(jnp.bfloat16),
        'wu': stack('wu').astype(jnp.bfloat16),
        'wd': stack('wd').astype(jnp.bfloat16),
        'final_norm': params['final_norm'].reshape(1, D_MODEL),
    }


@jax.jit
def gemma_forward(prepared, input_ids, attention_mask):
    """Synthetic Gemma: returns last_hidden_state of shape (B, S, D_MODEL)."""
    B, S = input_ids.shape
    L = prepared['wq'].shape[0]

    # Embedding gather (glue, XLA) + Gemma embedding scale.
    x = jnp.take(prepared['embed'], input_ids, axis=0) * math.sqrt(D_MODEL)
    mask_f = attention_mask.astype(jnp.float32).reshape(B, 1, S)

    def w_spec(shape):
        return pl.BlockSpec((1,) + shape, lambda b, l: (l, 0, 0))

    return pl.pallas_call(
        gemma_fused_kernel,
        out_shape=jax.ShapeDtypeStruct((B, S, D_MODEL), jnp.float32),
        grid_spec=pltpu.PrefetchScalarGridSpec(
            num_scalar_prefetch=0,
            grid=(B, L),                                   # L last = 'arbitrary'
            in_specs=[
                pl.BlockSpec((1, S, D_MODEL), lambda b, l: (b, 0, 0)),   # embeds
                pl.BlockSpec((1, 1, S), lambda b, l: (b, 0, 0)),         # mask
                w_spec((1, D_MODEL)),                                    # n1
                w_spec((D_MODEL, D_MODEL)),                              # wq
                w_spec((D_MODEL, D_MODEL)),                              # wk
                w_spec((D_MODEL, D_MODEL)),                              # wv
                w_spec((D_MODEL, D_MODEL)),                              # wo
                w_spec((1, D_MODEL)),                                    # n2
                w_spec((D_MODEL, D_FF)),                                 # wg
                w_spec((D_MODEL, D_FF)),                                 # wu
                w_spec((D_FF, D_MODEL)),                                 # wd
                pl.BlockSpec((1, D_MODEL), lambda b, l: (0, 0)),         # final norm
            ],
            out_specs=pl.BlockSpec((1, S, D_MODEL), lambda b, l: (b, 0, 0)),
            scratch_shapes=[pltpu.VMEM((S, D_MODEL), jnp.float32)],
        ),
        compiler_params=pltpu.CompilerParams(
            dimension_semantics=("parallel", "arbitrary"),
            vmem_limit_bytes=32 * 1024 * 1024,
        ),
    )(x, mask_f, prepared['n1'], prepared['wq'], prepared['wk'], prepared['wv'],
      prepared['wo'], prepared['n2'], prepared['wg'], prepared['wu'],
      prepared['wd'], prepared['final_norm'])


# ----------------------------- tokenizer (host-side) -------------------------
class SimpleTokenizer:
    """Deterministic byte-level tokenizer mirroring the HF tokenizer interface."""
    PAD_ID = 0
    BOS_ID = 2

    def __init__(self, vocab_size=VOCAB):
        self.vocab_size = vocab_size
        self.padding_side = 'right'

    def encode(self, text, add_special_tokens=True):
        toks = [(b % (self.vocab_size - 3)) + 3 for b in text.encode('utf-8')]
        if add_special_tokens:
            toks = [self.BOS_ID] + toks
        return toks

    def __call__(self, prompts, add_special_tokens=True, truncation=True,
                 max_length=None, padding='max_length', return_tensors=None):
        ids, mask = [], []
        for text in prompts:
            t = self.encode(text, add_special_tokens=add_special_tokens)
            if truncation and max_length is not None:
                t = t[:max_length]
            m = [1] * len(t)
            if padding == 'max_length' and max_length is not None:
                pad = max_length - len(t)
                if self.padding_side == 'right':
                    t = t + [self.PAD_ID] * pad
                    m = m + [0] * pad
                else:
                    t = [self.PAD_ID] * pad + t
                    m = [0] * pad + m
            ids.append(t)
            mask.append(m)
        return SimpleNamespace(input_ids=jnp.asarray(ids, jnp.int32),
                               attention_mask=jnp.asarray(mask, jnp.int32))


# ----------------------------- TextEncoder (JAX) -----------------------------
class TextEncoder:
    """JAX/Pallas port of azula.plugins.sana.TextEncoder."""

    def __init__(self, gemma_params, tokenizer, max_length=300):
        self.gemma = prepare_gemma_params(gemma_params)
        self.tokenizer = tokenizer
        self.tokenizer.padding_side = 'right'
        self.max_length = max_length

    def __call__(self, prompt, instructions=tuple(DEFAULT_INSTRUCTIONS)):
        if isinstance(prompt, str):
            prompt = [prompt]
        prompt = [text.lower().strip() for text in prompt]
        if instructions:
            chi = '\n'.join(instructions)
            prompt = [chi + text if text else '' for text in prompt]
            max_length_all = self.max_length + len(self.tokenizer.encode(chi)) - 2
        else:
            max_length_all = self.max_length
        tokens = self.tokenizer(prompt, add_special_tokens=True, truncation=True,
                                max_length=max_length_all, padding='max_length',
                                return_tensors='jax')
        prompt_mask = tokens.attention_mask
        prompt_embeds = gemma_forward(self.gemma, tokens.input_ids, prompt_mask)
        S = prompt_embeds.shape[1]
        # select = [0, -max_length+1, ..., -1]  (converted to non-negative)
        select = jnp.asarray([0] + [S + i for i in range(-self.max_length + 1, 0)],
                             jnp.int32)
        return {'prompt_embeds': prompt_embeds[:, select],
                'prompt_mask': prompt_mask[:, select]}


# ----------------------------- deterministic params --------------------------
def init_gemma_params(key):
    params = {'layers': []}
    key, k = jax.random.split(key)
    params['embed'] = jax.random.normal(k, (VOCAB, D_MODEL), jnp.float32) * 0.02
    for _ in range(N_LAYERS):
        lp = {'n1': jnp.zeros((D_MODEL,), jnp.float32),
              'n2': jnp.zeros((D_MODEL,), jnp.float32)}
        for name, shape in [('wq', (D_MODEL, D_MODEL)), ('wk', (D_MODEL, D_MODEL)),
                            ('wv', (D_MODEL, D_MODEL)), ('wo', (D_MODEL, D_MODEL)),
                            ('wg', (D_MODEL, D_FF)), ('wu', (D_MODEL, D_FF)),
                            ('wd', (D_FF, D_MODEL))]:
            key, k = jax.random.split(key)
            lp[name] = jax.random.normal(k, shape, jnp.float32) * 0.02
        params['layers'].append(lp)
    params['final_norm'] = jnp.zeros((D_MODEL,), jnp.float32)
    return params


# ----------------------------- main -------------------------------------------
if __name__ == "__main__":
    tokenizer = SimpleTokenizer()
    gemma_params = init_gemma_params(jax.random.PRNGKey(0))

    # Small shapes: max_length=8, short instructions "user:\nsay" -> 10 tokens,
    # so padded sequence length = 8 + 10 - 2 = 16.
    encoder = TextEncoder(gemma_params, tokenizer, max_length=8)
    out = encoder(["A cat", "A busy city street at dusk"],
                  instructions=["user:", "say"])

    jax.block_until_ready(out['prompt_embeds'])
    jax.block_until_ready(out['prompt_mask'])

    assert out['prompt_embeds'].shape == (2, 8, D_MODEL), out['prompt_embeds'].shape
    assert out['prompt_mask'].shape == (2, 8), out['prompt_mask'].shape
    assert bool(jnp.all(jnp.isfinite(out['prompt_embeds'])))
    print("KERNEL_OK")
</pallas_src>

<mosaic_0001>
module attributes {stable_mosaic.version = 11 : i64} {
  func.func @gemma_fused_kernel(%arg0: i32, %arg1: i32, %arg2: memref<1x16x32xf32, #tpu.memory_space<vmem>>, %arg3: memref<1x1x16xf32, #tpu.memory_space<vmem>>, %arg4: memref<1x1x32xf32, #tpu.memory_space<vmem>>, %arg5: memref<1x32x32xbf16, #tpu.memory_space<vmem>>, %arg6: memref<1x32x32xbf16, #tpu.memory_space<vmem>>, %arg7: memref<1x32x32xbf16, #tpu.memory_space<vmem>>, %arg8: memref<1x32x32xbf16, #tpu.memory_space<vmem>>, %arg9: memref<1x1x32xf32, #tpu.memory_space<vmem>>, %arg10: memref<1x32x64xbf16, #tpu.memory_space<vmem>>, %arg11: memref<1x32x64xbf16, #tpu.memory_space<vmem>>, %arg12: memref<1x64x32xbf16, #tpu.memory_space<vmem>>, %arg13: memref<1x32xf32, #tpu.memory_space<vmem>>, %arg14: memref<1x16x32xf32, #tpu.memory_space<vmem>>, %arg15: memref<16x32xf32, #tpu.memory_space<vmem>>) attributes {dimension_semantics = [#tpu.dimension_semantics<parallel>, #tpu.dimension_semantics<arbitrary>], iteration_bounds = array<i64: 2, 2>, scalar_prefetch = 0 : i64, scratch_operands = 1 : i64, tpu.core_type = #tpu.core_type<tc>, window_params = [{transform_indices = @transform_0, window_bounds = array<i64: 1, 16, 32>}, {transform_indices = @transform_1, window_bounds = array<i64: 1, 1, 16>}, {transform_indices = @transform_2, window_bounds = array<i64: 1, 1, 32>}, {transform_indices = @transform_3, window_bounds = array<i64: 1, 32, 32>}, {transform_indices = @transform_4, window_bounds = array<i64: 1, 32, 32>}, {transform_indices = @transform_5, window_bounds = array<i64: 1, 32, 32>}, {transform_indices = @transform_6, window_bounds = array<i64: 1, 32, 32>}, {transform_indices = @transform_7, window_bounds = array<i64: 1, 1, 32>}, {transform_indices = @transform_8, window_bounds = array<i64: 1, 32, 64>}, {transform_indices = @transform_9, window_bounds = array<i64: 1, 32, 64>}, {transform_indices = @transform_10, window_bounds = array<i64: 1, 64, 32>}, {pipeline_mode = #tpu.pipeline_mode<synchronous>, transform_indices = @transform_11, window_bounds = array<i64: 1, 32>}, {transform_indices = @transform_12, window_bounds = array<i64: 1, 16, 32>}]} {
    %c0_i32 = arith.constant 0 : i32
    %0 = arith.cmpi eq, %arg1, %c0_i32 : i32
    %1 = arith.extui %0 : i1 to i32
    %c0_i32_0 = arith.constant 0 : i32
    %2 = arith.cmpi ne, %1, %c0_i32_0 : i32
    scf.if %2 {
      %c0_60 = arith.constant 0 : index
      %c0_61 = arith.constant 0 : index
      %c0_62 = arith.constant 0 : index
      %132 = vector.load %arg2[%c0_60, %c0_61, %c0_62] : memref<1x16x32xf32, #tpu.memory_space<vmem>>, vector<1x16x32xf32>
      %133 = vector.shape_cast %132 : vector<1x16x32xf32> to vector<16x32xf32>
      %c0_63 = arith.constant 0 : index
      %c0_64 = arith.constant 0 : index
      %134 = vector.load %arg15[%c0_63, %c0_64] : memref<16x32xf32, #tpu.memory_space<vmem>>, vector<16x32xf32>
      tpu.vector_store %arg15[%c0_63, %c0_64], %133 {strides = array<i32>} : memref<16x32xf32, #tpu.memory_space<vmem>>, vector<16x32xf32>,
    } else {
    }
    %c0 = arith.constant 0 : index
    %c0_1 = arith.constant 0 : index
    %3 = vector.load %arg15[%c0, %c0_1] : memref<16x32xf32, #tpu.memory_space<vmem>>, vector<16x32xf32>
    %4 = tpu.iota {dimensions = array<i32: 0>} : vector<16x16xi32>
    %5 = tpu.iota {dimensions = array<i32: 1>} : vector<16x16xi32>
    %c0_2 = arith.constant 0 : index
    %c0_3 = arith.constant 0 : index
    %c0_4 = arith.constant 0 : index
    %6 = vector.load %arg3[%c0_2, %c0_3, %c0_4] : memref<1x1x16xf32, #tpu.memory_space<vmem>>, vector<1x1x16xf32>
    %7 = vector.shape_cast %6 : vector<1x1x16xf32> to vector<1x16xf32>
    %cst = arith.constant 5.000000e-01 : f32
    %8 = vector.broadcast %cst : f32 to vector<1x16xf32>
    %9 = arith.cmpf ogt, %7, %8 : vector<1x16xf32>
    %10 = arith.cmpi sle, %5, %4 : vector<16x16xi32>
    %11 = vector.broadcast %9 : vector<1x16xi1> to vector<16x16xi1>
    %12 = arith.andi %10, %11 : vector<16x16xi1>
    %cst_5 = arith.constant 0.000000e+00 : f32
    %cst_6 = arith.constant -1.000000e+09 : f32
    %13 = vector.broadcast %cst_5 : f32 to vector<16x16xf32>
    %14 = vector.broadcast %cst_6 : f32 to vector<16x16xf32>
    %15 = arith.select %12, %13, %14 : vector<16x16xi1>, vector<16x16xf32>
    %c0_7 = arith.constant 0 : index
    %c0_8 = arith.constant 0 : index
    %c0_9 = arith.constant 0 : index
    %16 = vector.load %arg4[%c0_7, %c0_8, %c0_9] : memref<1x1x32xf32, #tpu.memory_space<vmem>>, vector<1x1x32xf32>
    %17 = vector.shape_cast %16 : vector<1x1x32xf32> to vector<1x32xf32>
    %18 = arith.mulf %3, %3 : vector<16x32xf32>
    %cst_10 = arith.constant dense<0.000000e+00> : vector<16xf32>
    %19 = vector.multi_reduction <add>, %18, %cst_10 [1] : vector<16x32xf32> to vector<16xf32>
    %20 = vector.shape_cast %19 : vector<16xf32> to vector<16x1xf32>
    %cst_11 = arith.constant 3.200000e+01 : f32
    %21 = vector.broadcast %cst_11 : f32 to vector<16x1xf32>
    %22 = arith.divf %20, %21 : vector<16x1xf32>
    %cst_12 = arith.constant 9.99999997E-7 : f32
    %23 = vector.broadcast %cst_12 : f32 to vector<16x1xf32>
    %24 = arith.addf %22, %23 : vector<16x1xf32>
    %25 = math.rsqrt %24 : vector<16x1xf32>
    %26 = vector.broadcast %25 : vector<16x1xf32> to vector<16x32xf32>
    %27 = arith.mulf %3, %26 : vector<16x32xf32>
    %cst_13 = arith.constant 1.000000e+00 : f32
    %28 = vector.broadcast %cst_13 : f32 to vector<1x32xf32>
    %29 = arith.addf %28, %17 : vector<1x32xf32>
    %30 = vector.broadcast %29 : vector<1x32xf32> to vector<16x32xf32>
    %31 = arith.mulf %27, %30 : vector<16x32xf32>
    %32 = arith.truncf %31 : vector<16x32xf32> to vector<16x32xbf16>
    %c0_14 = arith.constant 0 : index
    %c0_15 = arith.constant 0 : index
    %c0_16 = arith.constant 0 : index
    %33 = vector.load %arg5[%c0_14, %c0_15, %c0_16] : memref<1x32x32xbf16, #tpu.memory_space<vmem>>, vector<1x32x32xbf16>
    %34 = vector.shape_cast %33 : vector<1x32x32xbf16> to vector<32x32xbf16>
    %cst_17 = arith.constant dense<0.000000e+00> : vector<16x32xf32>
    %35 = tpu.matmul %32, %34, %cst_17 {dimension_numbers = #tpu.dot_dimension_numbers<[1], [0], [0], [1], [0, 0, 1, 1], [], []>} : vector<16x32xbf16>, vector<32x32xbf16>, vector<16x32xf32> -> vector<16x32xf32>
    %c0_18 = arith.constant 0 : index
    %c0_19 = arith.constant 0 : index
    %c0_20 = arith.constant 0 : index
    %36 = vector.load %arg6[%c0_18, %c0_19, %c0_20] : memref<1x32x32xbf16, #tpu.memory_space<vmem>>, vector<1x32x32xbf16>
    %37 = vector.shape_cast %36 : vector<1x32x32xbf16> to vector<32x32xbf16>
    %cst_21 = arith.constant dense<0.000000e+00> : vector<16x32xf32>
    %38 = tpu.matmul %32, %37, %cst_21 {dimension_numbers = #tpu.dot_dimension_numbers<[1], [0], [0], [1], [0, 0, 1, 1], [], []>} : vector<16x32xbf16>, vector<32x32xbf16>, vector<16x32xf32> -> vector<16x32xf32>
    %c0_22 = arith.constant 0 : index
    %c0_23 = arith.constant 0 : index
    %c0_24 = arith.constant 0 : index
    %39 = vector.load %arg7[%c0_22, %c0_23, %c0_24] : memref<1x32x32xbf16, #tpu.memory_space<vmem>>, vector<1x32x32xbf16>
    %40 = vector.shape_cast %39 : vector<1x32x32xbf16> to vector<32x32xbf16>
    %cst_25 = arith.constant dense<0.000000e+00> : vector<16x32xf32>
    %41 = tpu.matmul %32, %40, %cst_25 {dimension_numbers = #tpu.dot_dimension_numbers<[1], [0], [0], [1], [0, 0, 1, 1], [], []>} : vector<16x32xbf16>, vector<32x32xbf16>, vector<16x32xf32> -> vector<16x32xf32>
    %42 = vector.extract_strided_slice %35 {offsets = [0, 0], sizes = [16, 16], strides = [1, 1]} : vector<16x32xf32> to vector<16x16xf32>
    %43 = vector.extract_strided_slice %35 {offsets = [0, 16], sizes = [16, 16], strides = [1, 1]} : vector<16x32xf32> to vector<16x16xf32>
    %44 = vector.shape_cast %42 : vector<16x16xf32> to vector<1x16x16xf32>
    %45 = vector.shape_cast %43 : vector<16x16xf32> to vector<1x16x16xf32>
    %46 = tpu.concatenate %44, %45 in 0 : vector<1x16x16xf32>, vector<1x16x16xf32> -> vector<2x16x16xf32>
    %47 = arith.truncf %46 : vector<2x16x16xf32> to vector<2x16x16xbf16>
    %48 = vector.extract_strided_slice %38 {offsets = [0, 0], sizes = [16, 16], strides = [1, 1]} : vector<16x32xf32> to vector<16x16xf32>
    %49 = vector.extract_strided_slice %38 {offsets = [0, 16], sizes = [16, 16], strides = [1, 1]} : vector<16x32xf32> to vector<16x16xf32>
    %50 = vector.shape_cast %48 : vector<16x16xf32> to vector<1x16x16xf32>
    %51 = vector.shape_cast %49 : vector<16x16xf32> to vector<1x16x16xf32>
    %52 = tpu.concatenate %50, %51 in 0 : vector<1x16x16xf32>, vector<1x16x16xf32> -> vector<2x16x16xf32>
    %53 = arith.truncf %52 : vector<2x16x16xf32> to vector<2x16x16xbf16>
    %54 = vector.extract_strided_slice %41 {offsets = [0, 0], sizes = [16, 16], strides = [1, 1]} : vector<16x32xf32> to vector<16x16xf32>
    %55 = vector.extract_strided_slice %41 {offsets = [0, 16], sizes = [16, 16], strides = [1, 1]} : vector<16x32xf32> to vector<16x16xf32>
    %56 = vector.shape_cast %54 : vector<16x16xf32> to vector<1x16x16xf32>
    %57 = vector.shape_cast %55 : vector<16x16xf32> to vector<1x16x16xf32>
    %58 = tpu.concatenate %56, %57 in 0 : vector<1x16x16xf32>, vector<1x16x16xf32> -> vector<2x16x16xf32>
    %59 = arith.truncf %58 : vector<2x16x16xf32> to vector<2x16x16xbf16>
    "tpu.trace_start"() <{level = 10 : i32, message = "hqd,hkd->hqk"}> : () -> ()
    %cst_26 = arith.constant dense<0.000000e+00> : vector<2x16x16xf32>
    %60 = tpu.matmul %47, %53, %cst_26 {dimension_numbers = #tpu.dot_dimension_numbers<[2], [2], [1], [1], [0, 0, 0, 1, 1, 1], [0], [0]>} : vector<2x16x16xbf16>, vector<2x16x16xbf16>, vector<2x16x16xf32> -> vector<2x16x16xf32>
    "tpu.trace_stop"() : () -> ()
    %61 = vector.shape_cast %15 : vector<16x16xf32> to vector<1x16x16xf32>
    %62 = vector.broadcast %61 : vector<1x16x16xf32> to vector<2x16x16xf32>
    %63 = arith.addf %60, %62 : vector<2x16x16xf32>
    %cst_27 = arith.constant dense<0xFF800000> : vector<2x16xf32>
    %64 = vector.multi_reduction <maximumf>, %63, %cst_27 [2] : vector<2x16x16xf32> to vector<2x16xf32>
    %65 = vector.shape_cast %64 : vector<2x16xf32> to vector<2x16x1xf32>
    %66 = vector.broadcast %65 : vector<2x16x1xf32> to vector<2x16x16xf32>
    %67 = arith.subf %63, %66 : vector<2x16x16xf32>
    %68 = math.exp %67 : vector<2x16x16xf32>
    %cst_28 = arith.constant dense<0.000000e+00> : vector<2x16xf32>
    %69 = vector.multi_reduction <add>, %68, %cst_28 [2] : vector<2x16x16xf32> to vector<2x16xf32>
    %70 = vector.shape_cast %69 : vector<2x16xf32> to vector<2x16x1xf32>
    %71 = tpu.reciprocal %70 {approx = true} : vector<2x16x1xf32> -> vector<2x16x1xf32>
    %72 = vector.broadcast %71 : vector<2x16x1xf32> to vector<2x16x16xf32>
    %73 = arith.mulf %68, %72 : vector<2x16x16xf32>
    %74 = arith.truncf %73 : vector<2x16x16xf32> to vector<2x16x16xbf16>
    "tpu.trace_start"() <{level = 10 : i32, message = "hqk,hkd->hqd"}> : () -> ()
    %cst_29 = arith.constant dense<0.000000e+00> : vector<2x16x16xf32>
    %75 = tpu.matmul %74, %59, %cst_29 {dimension_numbers = #tpu.dot_dimension_numbers<[2], [1], [1], [2], [0, 0, 0, 1, 1, 2], [0], [0]>} : vector<2x16x16xbf16>, vector<2x16x16xbf16>, vector<2x16x16xf32> -> vector<2x16x16xf32>
    "tpu.trace_stop"() : () -> ()
    %76 = vector.extract_strided_slice %75 {offsets = [0, 0, 0], sizes = [1, 16, 16], strides = [1, 1, 1]} : vector<2x16x16xf32> to vector<1x16x16xf32>
    %77 = vector.shape_cast %76 : vector<1x16x16xf32> to vector<16x16xf32>
    %78 = vector.extract_strided_slice %75 {offsets = [1, 0, 0], sizes = [1, 16, 16], strides = [1, 1, 1]} : vector<2x16x16xf32> to vector<1x16x16xf32>
    %79 = vector.shape_cast %78 : vector<1x16x16xf32> to vector<16x16xf32>
    %80 = tpu.concatenate %77, %79 in 1 : vector<16x16xf32>, vector<16x16xf32> -> vector<16x32xf32>
    %81 = arith.truncf %80 : vector<16x32xf32> to vector<16x32xbf16>
    %c0_30 = arith.constant 0 : index
    %c0_31 = arith.constant 0 : index
    %c0_32 = arith.constant 0 : index
    %82 = vector.load %arg8[%c0_30, %c0_31, %c0_32] : memref<1x32x32xbf16, #tpu.memory_space<vmem>>, vector<1x32x32xbf16>
    %83 = vector.shape_cast %82 : vector<1x32x32xbf16> to vector<32x32xbf16>
    %cst_33 = arith.constant dense<0.000000e+00> : vector<16x32xf32>
    %84 = tpu.matmul %81, %83, %cst_33 {dimension_numbers = #tpu.dot_dimension_numbers<[1], [0], [0], [1], [0, 0, 1, 1], [], []>} : vector<16x32xbf16>, vector<32x32xbf16>, vector<16x32xf32> -> vector<16x32xf32>
    %85 = arith.addf %3, %84 : vector<16x32xf32>
    %c0_34 = arith.constant 0 : index
    %c0_35 = arith.constant 0 : index
    %c0_36 = arith.constant 0 : index
    %86 = vector.load %arg9[%c0_34, %c0_35, %c0_36] : memref<1x1x32xf32, #tpu.memory_space<vmem>>, vector<1x1x32xf32>
    %87 = vector.shape_cast %86 : vector<1x1x32xf32> to vector<1x32xf32>
    %88 = arith.mulf %85, %85 : vector<16x32xf32>
    %cst_37 = arith.constant dense<0.000000e+00> : vector<16xf32>
    %89 = vector.multi_reduction <add>, %88, %cst_37 [1] : vector<16x32xf32> to vector<16xf32>
    %90 = vector.shape_cast %89 : vector<16xf32> to vector<16x1xf32>
    %cst_38 = arith.constant 3.200000e+01 : f32
    %91 = vector.broadcast %cst_38 : f32 to vector<16x1xf32>
    %92 = arith.divf %90, %91 : vector<16x1xf32>
    %cst_39 = arith.constant 9.99999997E-7 : f32
    %93 = vector.broadcast %cst_39 : f32 to vector<16x1xf32>
    %94 = arith.addf %92, %93 : vector<16x1xf32>
    %95 = math.rsqrt %94 : vector<16x1xf32>
    %96 = vector.broadcast %95 : vector<16x1xf32> to vector<16x32xf32>
    %97 = arith.mulf %85, %96 : vector<16x32xf32>
    %cst_40 = arith.constant 1.000000e+00 : f32
    %98 = vector.broadcast %cst_40 : f32 to vector<1x32xf32>
    %99 = arith.addf %98, %87 : vector<1x32xf32>
    %100 = vector.broadcast %99 : vector<1x32xf32> to vector<16x32xf32>
    %101 = arith.mulf %97, %100 : vector<16x32xf32>
    %102 = arith.truncf %101 : vector<16x32xf32> to vector<16x32xbf16>
    %c0_41 = arith.constant 0 : index
    %c0_42 = arith.constant 0 : index
    %c0_43 = arith.constant 0 : index
    %103 = vector.load %arg10[%c0_41, %c0_42, %c0_43] : memref<1x32x64xbf16, #tpu.memory_space<vmem>>, vector<1x32x64xbf16>
    %104 = vector.shape_cast %103 : vector<1x32x64xbf16> to vector<32x64xbf16>
    %cst_44 = arith.constant dense<0.000000e+00> : vector<16x64xf32>
    %105 = tpu.matmul %102, %104, %cst_44 {dimension_numbers = #tpu.dot_dimension_numbers<[1], [0], [0], [1], [0, 0, 1, 1], [], []>} : vector<16x32xbf16>, vector<32x64xbf16>, vector<16x64xf32> -> vector<16x64xf32>
    %106 = arith.mulf %105, %105 : vector<16x64xf32>
    %107 = arith.mulf %105, %106 : vector<16x64xf32>
    %cst_45 = arith.constant 4.471500e-02 : f32
    %108 = vector.broadcast %cst_45 : f32 to vector<16x64xf32>
    %109 = arith.mulf %108, %107 : vector<16x64xf32>
    %110 = arith.addf %105, %109 : vector<16x64xf32>
    %cst_46 = arith.constant 0.797884583 : f32
    %111 = vector.broadcast %cst_46 : f32 to vector<16x64xf32>
    %112 = arith.mulf %111, %110 : vector<16x64xf32>
    %113 = math.tanh %112 : vector<16x64xf32>
    %cst_47 = arith.constant 1.000000e+00 : f32
    %114 = vector.broadcast %cst_47 : f32 to vector<16x64xf32>
    %115 = arith.addf %114, %113 : vector<16x64xf32>
    %cst_48 = arith.constant 5.000000e-01 : f32
    %116 = vector.broadcast %cst_48 : f32 to vector<16x64xf32>
    %117 = arith.mulf %116, %115 : vector<16x64xf32>
    %118 = arith.mulf %105, %117 : vector<16x64xf32>
    %c0_49 = arith.constant 0 : index
    %c0_50 = arith.constant 0 : index
    %c0_51 = arith.constant 0 : index
    %119 = vector.load %arg11[%c0_49, %c0_50, %c0_51] : memref<1x32x64xbf16, #tpu.memory_space<vmem>>, vector<1x32x64xbf16>
    %120 = vector.shape_cast %119 : vector<1x32x64xbf16> to vector<32x64xbf16>
    %cst_52 = arith.constant dense<0.000000e+00> : vector<16x64xf32>
    %121 = tpu.matmul %102, %120, %cst_52 {dimension_numbers = #tpu.dot_dimension_numbers<[1], [0], [0], [1], [0, 0, 1, 1], [], []>} : vector<16x32xbf16>, vector<32x64xbf16>, vector<16x64xf32> -> vector<16x64xf32>
    %122 = arith.mulf %118, %121 : vector<16x64xf32>
    %123 = arith.truncf %122 : vector<16x64xf32> to vector<16x64xbf16>
    %c0_53 = arith.constant 0 : index
    %c0_54 = arith.constant 0 : index
    %c0_55 = arith.constant 0 : index
    %124 = vector.load %arg12[%c0_53, %c0_54, %c0_55] : memref<1x64x32xbf16, #tpu.memory_space<vmem>>, vector<1x64x32xbf16>
    %125 = vector.shape_cast %124 : vector<1x64x32xbf16> to vector<64x32xbf16>
    %cst_56 = arith.constant dense<0.000000e+00> : vector<16x32xf32>
    %126 = tpu.matmul %123, %125, %cst_56 {dimension_numbers = #tpu.dot_dimension_numbers<[1], [0], [0], [1], [0, 0, 1, 1], [], []>} : vector<16x64xbf16>, vector<64x32xbf16>, vector<16x32xf32> -> vector<16x32xf32>
    %127 = arith.addf %85, %126 : vector<16x32xf32>
    %c0_57 = arith.constant 0 : index
    %c0_58 = arith.constant 0 : index
    %128 = vector.load %arg15[%c0_57, %c0_58] : memref<16x32xf32, #tpu.memory_space<vmem>>, vector<16x32xf32>
    tpu.vector_store %arg15[%c0_57, %c0_58], %127 {strides = array<i32>} : memref<16x32xf32, #tpu.memory_space<vmem>>, vector<16x32xf32>,
    %c1_i32 = arith.constant 1 : i32
    %129 = arith.cmpi eq, %arg1, %c1_i32 : i32
    %130 = arith.extui %129 : i1 to i32
    %c0_i32_59 = arith.constant 0 : i32
    %131 = arith.cmpi ne, %130, %c0_i32_59 : i32
    scf.if %131 {
      %c0_60 = arith.constant 0 : index
      %c0_61 = arith.constant 0 : index
      %132 = vector.load %arg13[%c0_60, %c0_61] : memref<1x32xf32, #tpu.memory_space<vmem>>, vector<1x32xf32>
      %133 = arith.mulf %127, %127 : vector<16x32xf32>
      %cst_62 = arith.constant dense<0.000000e+00> : vector<16xf32>
      %134 = vector.multi_reduction <add>, %133, %cst_62 [1] : vector<16x32xf32> to vector<16xf32>
      %135 = vector.shape_cast %134 : vector<16xf32> to vector<16x1xf32>
      %cst_63 = arith.constant 3.200000e+01 : f32
      %136 = vector.broadcast %cst_63 : f32 to vector<16x1xf32>
      %137 = arith.divf %135, %136 : vector<16x1xf32>
      %cst_64 = arith.constant 9.99999997E-7 : f32
      %138 = vector.broadcast %cst_64 : f32 to vector<16x1xf32>
      %139 = arith.addf %137, %138 : vector<16x1xf32>
      %140 = math.rsqrt %139 : vector<16x1xf32>
      %141 = vector.broadcast %140 : vector<16x1xf32> to vector<16x32xf32>
      %142 = arith.mulf %127, %141 : vector<16x32xf32>
      %cst_65 = arith.constant 1.000000e+00 : f32
      %143 = vector.broadcast %cst_65 : f32 to vector<1x32xf32>
      %144 = arith.addf %143, %132 : vector<1x32xf32>
      %145 = vector.broadcast %144 : vector<1x32xf32> to vector<16x32xf32>
      %146 = arith.mulf %142, %145 : vector<16x32xf32>
      %c0_66 = arith.constant 0 : index
      %c0_67 = arith.constant 0 : index
      %c0_68 = arith.constant 0 : index
      %147 = vector.load %arg14[%c0_66, %c0_67, %c0_68] : memref<1x16x32xf32, #tpu.memory_space<vmem>>, vector<1x16x32xf32>
      %148 = vector.shape_cast %147 : vector<1x16x32xf32> to vector<16x32xf32>
      %149 = vector.shape_cast %146 : vector<16x32xf32> to vector<1x16x32xf32>
      tpu.vector_store %arg14[%c0_66, %c0_67, %c0_68], %149 {strides = array<i32>} : memref<1x16x32xf32, #tpu.memory_space<vmem>>, vector<1x16x32xf32>,
    } else {
    }
    return
  }
  func.func @transform_0(%arg0: i32, %arg1: i32) -> (i32, i32, i32) {
    %c0_i32 = arith.constant 0 : i32
    %c0_i32_0 = arith.constant 0 : i32
    %c0_i32_1 = arith.constant 0 : i32
    return %arg0, %c0_i32, %c0_i32_0 : i32, i32, i32
  }
  func.func @transform_1(%arg0: i32, %arg1: i32) -> (i32, i32, i32) {
    %c0_i32 = arith.constant 0 : i32
    %c0_i32_0 = arith.constant 0 : i32
    %c0_i32_1 = arith.constant 0 : i32
    return %arg0, %c0_i32, %c0_i32_0 : i32, i32, i32
  }
  func.func @transform_2(%arg0: i32, %arg1: i32) -> (i32, i32, i32) {
    %c0_i32 = arith.constant 0 : i32
    %c0_i32_0 = arith.constant 0 : i32
    %c0_i32_1 = arith.constant 0 : i32
    return %arg1, %c0_i32, %c0_i32_0 : i32, i32, i32
  }
  func.func @transform_3(%arg0: i32, %arg1: i32) -> (i32, i32, i32) {
    %c0_i32 = arith.constant 0 : i32
    %c0_i32_0 = arith.constant 0 : i32
    %c0_i32_1 = arith.constant 0 : i32
    return %arg1, %c0_i32, %c0_i32_0 : i32, i32, i32
  }
  func.func @transform_4(%arg0: i32, %arg1: i32) -> (i32, i32, i32) {
    %c0_i32 = arith.constant 0 : i32
    %c0_i32_0 = arith.constant 0 : i32
    %c0_i32_1 = arith.constant 0 : i32
    return %arg1, %c0_i32, %c0_i32_0 : i32, i32, i32
  }
  func.func @transform_5(%arg0: i32, %arg1: i32) -> (i32, i32, i32) {
    %c0_i32 = arith.constant 0 : i32
    %c0_i32_0 = arith.constant 0 : i32
    %c0_i32_1 = arith.constant 0 : i32
    return %arg1, %c0_i32, %c0_i32_0 : i32, i32, i32
  }
  func.func @transform_6(%arg0: i32, %arg1: i32) -> (i32, i32, i32) {
    %c0_i32 = arith.constant 0 : i32
    %c0_i32_0 = arith.constant 0 : i32
    %c0_i32_1 = arith.constant 0 : i32
    return %arg1, %c0_i32, %c0_i32_0 : i32, i32, i32
  }
  func.func @transform_7(%arg0: i32, %arg1: i32) -> (i32, i32, i32) {
    %c0_i32 = arith.constant 0 : i32
    %c0_i32_0 = arith.constant 0 : i32
    %c0_i32_1 = arith.constant 0 : i32
    return %arg1, %c0_i32, %c0_i32_0 : i32, i32, i32
  }
  func.func @transform_8(%arg0: i32, %arg1: i32) -> (i32, i32, i32) {
    %c0_i32 = arith.constant 0 : i32
    %c0_i32_0 = arith.constant 0 : i32
    %c0_i32_1 = arith.constant 0 : i32
    return %arg1, %c0_i32, %c0_i32_0 : i32, i32, i32
  }
  func.func @transform_9(%arg0: i32, %arg1: i32) -> (i32, i32, i32) {
    %c0_i32 = arith.constant 0 : i32
    %c0_i32_0 = arith.constant 0 : i32
    %c0_i32_1 = arith.constant 0 : i32
    return %arg1, %c0_i32, %c0_i32_0 : i32, i32, i32
  }
  func.func @transform_10(%arg0: i32, %arg1: i32) -> (i32, i32, i32) {
    %c0_i32 = arith.constant 0 : i32
    %c0_i32_0 = arith.constant 0 : i32
    %c0_i32_1 = arith.constant 0 : i32
    return %arg1, %c0_i32, %c0_i32_0 : i32, i32, i32
  }
  func.func @transform_11(%arg0: i32, %arg1: i32) -> (i32, i32) {
    %c0_i32 = arith.constant 0 : i32
    %c0_i32_0 = arith.constant 0 : i32
    %c0_i32_1 = arith.constant 0 : i32
    return %c0_i32, %c0_i32_0 : i32, i32
  }
  func.func @transform_12(%arg0: i32, %arg1: i32) -> (i32, i32, i32) {
    %c0_i32 = arith.constant 0 : i32
    %c0_i32_0 = arith.constant 0 : i32
    %c0_i32_1 = arith.constant 0 : i32
    return %arg0, %c0_i32, %c0_i32_0 : i32, i32, i32
  }
}

</mosaic_0001>

<llo_original>
// kernel: gemma_forward.1
$region0: #{gemma_forward.1}
  #allocation0 [shape = 'u32[]', space=smem, size = 0x4, offset = 0x4, fixed_abs, tag = 'smem constant byte address 0x4 - core index']
  #allocation1 [shape = 'u32[72,128]{1,0:T(1,128)}', space=vmem, size = 0x9000, scoped, tag = 'internal scratch']
  #allocation2 [shape = 'f32[16,32]{1,0:T(8,128)}', space=vmem, size = 0x2000, scoped, tag = 'scratch operand']
  %s0 = inlined_call_operand.vmem [shape: f32[2,16,32], index: 0, kind: input, shape index: {}]
  %s1 = inlined_call_operand.vmem [shape: f32[2,1,16], index: 1, kind: input, shape index: {}]
  %s2 = inlined_call_operand.vmem [shape: f32[2,1,32], index: 2, kind: input, shape index: {}]
  %s3 = inlined_call_operand.vmem [shape: bf16[2,32,32], index: 3, kind: input, shape index: {}]
  %s4 = inlined_call_operand.vmem [shape: bf16[2,32,32], index: 4, kind: input, shape index: {}]
  %s5 = inlined_call_operand.vmem [shape: bf16[2,32,32], index: 5, kind: input, shape index: {}]
  %s6 = inlined_call_operand.vmem [shape: bf16[2,32,32], index: 6, kind: input, shape index: {}]
  %s7 = inlined_call_operand.vmem [shape: f32[2,1,32], index: 7, kind: input, shape index: {}]
  %s8 = inlined_call_operand.vmem [shape: bf16[2,32,64], index: 8, kind: input, shape index: {}]
  %s9 = inlined_call_operand.vmem [shape: bf16[2,32,64], index: 9, kind: input, shape index: {}]
  %s10 = inlined_call_operand.vmem [shape: bf16[2,64,32], index: 10, kind: input, shape index: {}]
  %s11 = inlined_call_operand.vmem [shape: f32[1,32], index: 11, kind: input, shape index: {}]
  %s12 = inlined_call_operand.hbm [shape: f32[2,16,32], index: 12, kind: output, shape index: {}]
  %s13 = sld [smem:[#allocation0]]
  $region89: #{gemma_forward.1} parent=0
    _
  %s15 = ssub.s32 1, %s13
  %s16 = scalar_select 0, %s15, %s13
  $region1: #{gemma_forward.1} parent=0
    #allocation3 [shape = 'u8[16384]{0}', space=vmem, size = 0x4000, scoped, tag = 'output window, operand 0']
    #allocation4 [shape = 's32[2]{0}', space=sflag, size = 0x8, scoped, tag = 'scoped memory for gemma_forward.1']
    %17 = vsyncpa [#allocation4], 0
    %s18 = scalar_lea.sflag [#allocation4], 1
    %19 = vsyncpa %s18, 0
    loop: start=0, step=1, limit=6
    $region2: #{gemma_forward.1} parent=1 // loop_pre_header
      _
    $region3: #{gemma_forward.1} parent=1 // loop_header
      %s21 = sphi 0, %s25
      %p22 = scmp.ge.s32.totalorder %s21, 6
      %s28 = sphi 0, %s40
      %s29 = sphi 0, %s36
      %s30 = sphi 0, %s28
      %s31 = sphi 0, %s29
      %s32 = sphi 0, %s30
      %s33 = sphi 0, %s31
      %s43 = sphi 0, %s45
      %s46 = sphi 0, %s43
      %s47 = sphi 0, %s46
      %s63 = sphi 0, %s47
      %s69 = sphi 0, %s71
      %s72 = sphi 0, %s69
      %s73 = sphi 0, %s72
      %s89 = sphi 0, %s73
      %s95 = sphi 0, %s97
      %s98 = sphi 0, %s95
      %s99 = sphi 0, %s98
      %s115 = sphi 0, %s99
      %s121 = sphi 0, %s123
      %s124 = sphi 0, %s121
      %s125 = sphi 0, %s124
      %s141 = sphi 0, %s125
      %s147 = sphi 0, %s149
      %s150 = sphi 0, %s147
      %s151 = sphi 0, %s150
      %s167 = sphi 0, %s151
      %s173 = sphi 0, %s175
      %s176 = sphi 0, %s173
      %s177 = sphi 0, %s176
      %s193 = sphi 0, %s177
      %s199 = sphi 0, %s201
      %s202 = sphi 0, %s199
      %s203 = sphi 0, %s202
      %s219 = sphi 0, %s203
      %s225 = sphi 0, %s227
      %s228 = sphi 0, %s225
      %s229 = sphi 0, %s228
      %s245 = sphi 0, %s229
      %s251 = sphi 0, %s253
      %s254 = sphi 0, %s251
      %s255 = sphi 0, %s254
      %s271 = sphi 0, %s255
      %s277 = sphi 0, %s279
      %s280 = sphi 0, %s277
      %s281 = sphi 0, %s280
      %s297 = sphi 0, %s281
      %s303 = sphi 0, %s305
      %s306 = sphi 0, %s303
      %s307 = sphi 0, %s306
      %s323 = sphi 0, %s307
      %s327 = sphi 0, %s327
      %s329 = sphi 0, %s327
      %s330 = sphi 0, %s329
      %s344 = sphi 0, %s330
      %s350 = sphi 0, %s352
      %s353 = sphi 0, %s350
      %s354 = sphi 0, %s353
      %s370 = sphi 0, %s354
    $region4: #{gemma_forward.1} parent=1 // loop_header_branch
      %24 = sbr.rel (%p22) target = $region8
    $region5: #{gemma_forward.1} parent=1 // loop_body
      %s26 = ssub.s32 %s21, 1
      %s27 = ssub.s32 %s21, 2
      %s34 = sadd.s32 1, %s29
      %p35 = scmp.ge.s32.totalorder %s34, 2
      %s36 = scalar_select %p35, 0, %s34
      %s37 = sadd.s32 1, %s28
      %s38 = scalar_select %p35, %s37, %s28
      %p39 = scmp.ge.s32.totalorder %s38, 2
      %s40 = scalar_select %p39, 0, %s38
      %s41 = ssub.s32 %s28, %s40
      %p42 = scmp.eq.s32.totalorder %s41, 0
      %s44 = sadd.s32 %s43, 1
      %s45 = scalar_select %p42, %s43, %s44
      %p48 = pneg %p42
      %p49 = scmp.eq.s32.totalorder %s21, 3
      %p50 = por %p48, %p49
      %p51 = scmp.ne.s32.totalorder %s43, %s46
      %p52 = scmp.eq.s32.totalorder %s21, 0
      %p53 = por %p51, %p52
      %p54 = scmp.ne.s32.totalorder %s43, %s46
      %p55 = scmp.eq.s32.totalorder %s26, 3
      %p56 = por %p54, %p55
      %p57 = scmp.ne.s32.totalorder %s46, %s47
      %p58 = scmp.eq.s32.totalorder %s26, 0
      %p59 = por %p57, %p58
      %p60 = scmp.ne.s32.totalorder %s46, %s47
      %p61 = scmp.eq.s32.totalorder %s27, 3
      %p62 = por %p60, %p61
      %p64 = scmp.ne.s32.totalorder %s47, %s63
      %p65 = scmp.eq.s32.totalorder %s27, 0
      %p66 = por %p64, %p65
      %s67 = ssub.s32 %s28, %s40
      %p68 = scmp.eq.s32.totalorder %s67, 0
      %s70 = sadd.s32 %s69, 1
      %s71 = scalar_select %p68, %s69, %s70
      %p74 = pneg %p68
      %p75 = scmp.eq.s32.totalorder %s21, 3
      %p76 = por %p74, %p75
      %p77 = scmp.ne.s32.totalorder %s69, %s72
      %p78 = scmp.eq.s32.totalorder %s21, 0
      %p79 = por %p77, %p78
      %p80 = scmp.ne.s32.totalorder %s69, %s72
      %p81 = scmp.eq.s32.totalorder %s26, 3
      %p82 = por %p80, %p81
      %p83 = scmp.ne.s32.totalorder %s72, %s73
      %p84 = scmp.eq.s32.totalorder %s26, 0
      %p85 = por %p83, %p84
      %p86 = scmp.ne.s32.totalorder %s72, %s73
      %p87 = scmp.eq.s32.totalorder %s27, 3
      %p88 = por %p86, %p87
      %p90 = scmp.ne.s32.totalorder %s73, %s89
      %p91 = scmp.eq.s32.totalorder %s27, 0
      %p92 = por %p90, %p91
      %s93 = ssub.s32 %s29, %s36
      %p94 = scmp.eq.s32.totalorder %s93, 0
      %s96 = sadd.s32 %s95, 1
      %s97 = scalar_select %p94, %s95, %s96
      %p100 = pneg %p94
      %p101 = scmp.eq.s32.totalorder %s21, 3
      %p102 = por %p100, %p101
      %p103 = scmp.ne.s32.totalorder %s95, %s98
      %p104 = scmp.eq.s32.totalorder %s21, 0
      %p105 = por %p103, %p104
      %p106 = scmp.ne.s32.totalorder %s95, %s98
      %p107 = scmp.eq.s32.totalorder %s26, 3
      %p108 = por %p106, %p107
      %p109 = scmp.ne.s32.totalorder %s98, %s99
      %p110 = scmp.eq.s32.totalorder %s26, 0
      %p111 = por %p109, %p110
      %p112 = scmp.ne.s32.totalorder %s98, %s99
      %p113 = scmp.eq.s32.totalorder %s27, 3
      %p114 = por %p112, %p113
      %p116 = scmp.ne.s32.totalorder %s99, %s115
      %p117 = scmp.eq.s32.totalorder %s27, 0
      %p118 = por %p116, %p117
      %s119 = ssub.s32 %s29, %s36
      %p120 = scmp.eq.s32.totalorder %s119, 0
      %s122 = sadd.s32 %s121, 1
      %s123 = scalar_select %p120, %s121, %s122
      %p126 = pneg %p120
      %p127 = scmp.eq.s32.totalorder %s21, 3
      %p128 = por %p126, %p127
      %p129 = scmp.ne.s32.totalorder %s121, %s124
      %p130 = scmp.eq.s32.totalorder %s21, 0
      %p131 = por %p129, %p130
      %p132 = scmp.ne.s32.totalorder %s121, %s124
      %p133 = scmp.eq.s32.totalorder %s26, 3
      %p134 = por %p132, %p133
      %p135 = scmp.ne.s32.totalorder %s124, %s125
      %p136 = scmp.eq.s32.totalorder %s26, 0
      %p137 = por %p135, %p136
      %p138 = scmp.ne.s32.totalorder %s124, %s125
      %p139 = scmp.eq.s32.totalorder %s27, 3
      %p140 = por %p138, %p139
      %p142 = scmp.ne.s32.totalorder %s125, %s141
      %p143 = scmp.eq.s32.totalorder %s27, 0
      %p144 = por %p142, %p143
      %s145 = ssub.s32 %s29, %s36
      %p146 = scmp.eq.s32.totalorder %s145, 0
      %s148 = sadd.s32 %s147, 1
      %s149 = scalar_select %p146, %s147, %s148
      %p152 = pneg %p146
      %p153 = scmp.eq.s32.totalorder %s21, 3
      %p154 = por %p152, %p153
      %p155 = scmp.ne.s32.totalorder %s147, %s150
      %p156 = scmp.eq.s32.totalorder %s21, 0
      %p157 = por %p155, %p156
      %p158 = scmp.ne.s32.totalorder %s147, %s150
      %p159 = scmp.eq.s32.totalorder %s26, 3
      %p160 = por %p158, %p159
      %p161 = scmp.ne.s32.totalorder %s150, %s151
      %p162 = scmp.eq.s32.totalorder %s26, 0
      %p163 = por %p161, %p162
      %p164 = scmp.ne.s32.totalorder %s150, %s151
      %p165 = scmp.eq.s32.totalorder %s27, 3
      %p166 = por %p164, %p165
      %p168 = scmp.ne.s32.totalorder %s151, %s167
      %p169 = scmp.eq.s32.totalorder %s27, 0
      %p170 = por %p168, %p169
      %s171 = ssub.s32 %s29, %s36
      %p172 = scmp.eq.s32.totalorder %s171, 0
      %s174 = sadd.s32 %s173, 1
      %s175 = scalar_select %p172, %s173, %s174
      %p178 = pneg %p172
      %p179 = scmp.eq.s32.totalorder %s21, 3
      %p180 = por %p178, %p179
      %p181 = scmp.ne.s32.totalorder %s173, %s176
      %p182 = scmp.eq.s32.totalorder %s21, 0
      %p183 = por %p181, %p182
      %p184 = scmp.ne.s32.totalorder %s173, %s176
      %p185 = scmp.eq.s32.totalorder %s26, 3
      %p186 = por %p184, %p185
      %p187 = scmp.ne.s32.totalorder %s176, %s177
      %p188 = scmp.eq.s32.totalorder %s26, 0
      %p189 = por %p187, %p188
      %p190 = scmp.ne.s32.totalorder %s176, %s177
      %p191 = scmp.eq.s32.totalorder %s27, 3
      %p192 = por %p190, %p191
      %p194 = scmp.ne.s32.totalorder %s177, %s193
      %p195 = scmp.eq.s32.totalorder %s27, 0
      %p196 = por %p194, %p195
      %s197 = ssub.s32 %s29, %s36
      %p198 = scmp.eq.s32.totalorder %s197, 0
      %s200 = sadd.s32 %s199, 1
      %s201 = scalar_select %p198, %s199, %s200
      %p204 = pneg %p198
      %p205 = scmp.eq.s32.totalorder %s21, 3
      %p206 = por %p204, %p205
      %p207 = scmp.ne.s32.totalorder %s199, %s202
      %p208 = scmp.eq.s32.totalorder %s21, 0
      %p209 = por %p207, %p208
      %p210 = scmp.ne.s32.totalorder %s199, %s202
      %p211 = scmp.eq.s32.totalorder %s26, 3
      %p212 = por %p210, %p211
      %p213 = scmp.ne.s32.totalorder %s202, %s203
      %p214 = scmp.eq.s32.totalorder %s26, 0
      %p215 = por %p213, %p214
      %p216 = scmp.ne.s32.totalorder %s202, %s203
      %p217 = scmp.eq.s32.totalorder %s27, 3
      %p218 = por %p216, %p217
      %p220 = scmp.ne.s32.totalorder %s203, %s219
      %p221 = scmp.eq.s32.totalorder %s27, 0
      %p222 = por %p220, %p221
      %s223 = ssub.s32 %s29, %s36
      %p224 = scmp.eq.s32.totalorder %s223, 0
      %s226 = sadd.s32 %s225, 1
      %s227 = scalar_select %p224, %s225, %s226
      %p230 = pneg %p224
      %p231 = scmp.eq.s32.totalorder %s21, 3
      %p232 = por %p230, %p231
      %p233 = scmp.ne.s32.totalorder %s225, %s228
      %p234 = scmp.eq.s32.totalorder %s21, 0
      %p235 = por %p233, %p234
      %p236 = scmp.ne.s32.totalorder %s225, %s228
      %p237 = scmp.eq.s32.totalorder %s26, 3
      %p238 = por %p236, %p237
      %p239 = scmp.ne.s32.totalorder %s228, %s229
      %p240 = scmp.eq.s32.totalorder %s26, 0
      %p241 = por %p239, %p240
      %p242 = scmp.ne.s32.totalorder %s228, %s229
      %p243 = scmp.eq.s32.totalorder %s27, 3
      %p244 = por %p242, %p243
      %p246 = scmp.ne.s32.totalorder %s229, %s245
      %p247 = scmp.eq.s32.totalorder %s27, 0
      %p248 = por %p246, %p247
      %s249 = ssub.s32 %s29, %s36
      %p250 = scmp.eq.s32.totalorder %s249, 0
      %s252 = sadd.s32 %s251, 1
      %s253 = scalar_select %p250, %s251, %s252
      %p256 = pneg %p250
      %p257 = scmp.eq.s32.totalorder %s21, 3
      %p258 = por %p256, %p257
      %p259 = scmp.ne.s32.totalorder %s251, %s254
      %p260 = scmp.eq.s32.totalorder %s21, 0
      %p261 = por %p259, %p260
      %p262 = scmp.ne.s32.totalorder %s251, %s254
      %p263 = scmp.eq.s32.totalorder %s26, 3
      %p264 = por %p262, %p263
      %p265 = scmp.ne.s32.totalorder %s254, %s255
      %p266 = scmp.eq.s32.totalorder %s26, 0
      %p267 = por %p265, %p266
      %p268 = scmp.ne.s32.totalorder %s254, %s255
      %p269 = scmp.eq.s32.totalorder %s27, 3
      %p270 = por %p268, %p269
      %p272 = scmp.ne.s32.totalorder %s255, %s271
      %p273 = scmp.eq.s32.totalorder %s27, 0
      %p274 = por %p272, %p273
      %s275 = ssub.s32 %s29, %s36
      %p276 = scmp.eq.s32.totalorder %s275, 0
      %s278 = sadd.s32 %s277, 1
      %s279 = scalar_select %p276, %s277, %s278
      %p282 = pneg %p276
      %p283 = scmp.eq.s32.totalorder %s21, 3
      %p284 = por %p282, %p283
      %p285 = scmp.ne.s32.totalorder %s277, %s280
      %p286 = scmp.eq.s32.totalorder %s21, 0
      %p287 = por %p285, %p286
      %p288 = scmp.ne.s32.totalorder %s277, %s280
      %p289 = scmp.eq.s32.totalorder %s26, 3
      %p290 = por %p288, %p289
      %p291 = scmp.ne.s32.totalorder %s280, %s281
      %p292 = scmp.eq.s32.totalorder %s26, 0
      %p293 = por %p291, %p292
      %p294 = scmp.ne.s32.totalorder %s280, %s281
      %p295 = scmp.eq.s32.totalorder %s27, 3
      %p296 = por %p294, %p295
      %p298 = scmp.ne.s32.totalorder %s281, %s297
      %p299 = scmp.eq.s32.totalorder %s27, 0
      %p300 = por %p298, %p299
      %s301 = ssub.s32 %s29, %s36
      %p302 = scmp.eq.s32.totalorder %s301, 0
      %s304 = sadd.s32 %s303, 1
      %s305 = scalar_select %p302, %s303, %s304
      %p308 = pneg %p302
      %p309 = scmp.eq.s32.totalorder %s21, 3
      %p310 = por %p308, %p309
      %p311 = scmp.ne.s32.totalorder %s303, %s306
      %p312 = scmp.eq.s32.totalorder %s21, 0
      %p313 = por %p311, %p312
      %p314 = scmp.ne.s32.totalorder %s303, %s306
      %p315 = scmp.eq.s32.totalorder %s26, 3
      %p316 = por %p314, %p315
      %p317 = scmp.ne.s32.totalorder %s306, %s307
      %p318 = scmp.eq.s32.totalorder %s26, 0
      %p319 = por %p317, %p318
      %p320 = scmp.ne.s32.totalorder %s306, %s307
      %p321 = scmp.eq.s32.totalorder %s27, 3
      %p322 = por %p320, %p321
      %p324 = scmp.ne.s32.totalorder %s307, %s323
      %p325 = scmp.eq.s32.totalorder %s27, 0
      %p326 = por %p324, %p325
      %s328 = sadd.s32 %s327, 1
      %p331 = scmp.eq.s32.totalorder %s21, 3
      %p332 = scmp.ne.s32.totalorder %s327, %s329
      %p333 = scmp.eq.s32.totalorder %s21, 0
      %p334 = por %p332, %p333
      %p335 = scmp.ne.s32.totalorder %s327, %s329
      %p336 = scmp.eq.s32.totalorder %s26, 3
      %p337 = por %p335, %p336
      %p338 = scmp.ne.s32.totalorder %s329, %s330
      %p339 = scmp.eq.s32.totalorder %s26, 0
      %p340 = por %p338, %p339
      %p341 = scmp.ne.s32.totalorder %s329, %s330
      %p342 = scmp.eq.s32.totalorder %s27, 3
      %p343 = por %p341, %p342
      %p345 = scmp.ne.s32.totalorder %s330, %s344
      %p346 = scmp.eq.s32.totalorder %s27, 0
      %p347 = por %p345, %p346
      %s348 = ssub.s32 %s28, %s40
      %p349 = scmp.eq.s32.totalorder %s348, 0
      %s351 = sadd.s32 %s350, 1
      %s352 = scalar_select %p349, %s350, %s351
      %p355 = pneg %p349
      %p356 = scmp.eq.s32.totalorder %s21, 3
      %p357 = por %p355, %p356
      %p358 = scmp.ne.s32.totalorder %s350, %s353
      %p359 = scmp.eq.s32.totalorder %s21, 0
      %p360 = por %p358, %p359
      %p361 = scmp.ne.s32.totalorder %s350, %s353
      %p362 = scmp.eq.s32.totalorder %s26, 3
      %p363 = por %p361, %p362
      %p364 = scmp.ne.s32.totalorder %s353, %s354
      %p365 = scmp.eq.s32.totalorder %s26, 0
      %p366 = por %p364, %p365
      %p367 = scmp.ne.s32.totalorder %s353, %s354
      %p368 = scmp.eq.s32.totalorder %s27, 3
      %p369 = por %p367, %p368
      %p371 = scmp.ne.s32.totalorder %s354, %s370
      %p372 = scmp.eq.s32.totalorder %s27, 0
      %p373 = por %p371, %p372
      %p374 = scmp.le.s32.totalorder 1, %s21
      %p375 = scmp.lt.s32.totalorder %s21, 5
      %p376 = pnand %p374, %p375
      %p377 = pneg %p376
      // Predicated region
      $region9: #{gemma_forward.1} parent=5 // pred_check
        _
      $region10: #{gemma_forward.1} parent=5 // pred_check_branch
        %379 = sbr.rel (%p376) target = $region12
      $region11: #{gemma_forward.1} parent=5 // pred_region
        %s380 = ssub.s32 %s21, 1
        // Predicated region
        $region13: #{gemma_forward.1} parent=11 // pred_check
          %p381 = pneg %p340
        $region14: #{gemma_forward.1} parent=11 // pred_check_branch
          %383 = sbr.rel (%p381) target = $region16
        $region15: #{gemma_forward.1} parent=11 // pred_region
          _
        $region16: #{gemma_forward.1} parent=11 // pred_fallthru
          _
      $region12: #{gemma_forward.1} parent=5 // pred_fallthru
        _
      %p384 = scmp.lt.s32.totalorder %s21, 4
      // Predicated region
      $region17: #{gemma_forward.1} parent=5 // pred_check
        %p385 = pneg %p384
      $region18: #{gemma_forward.1} parent=5 // pred_check_branch
        %387 = sbr.rel (%p385) target = $region20
      $region19: #{gemma_forward.1} parent=5 // pred_region
        // Predicated region
        $region21: #{gemma_forward.1} parent=19 // pred_check
          %p388 = pneg %p53
        $region22: #{gemma_forward.1} parent=19 // pred_check_branch
          %390 = sbr.rel (%p388) target = $region24
        $region23: #{gemma_forward.1} parent=19 // pred_region
          %p391 = scmp.lt.s32.totalorder %s28, 1
          %s392 = scalar_select %p391, %s28, 1
          %s393 = smul.addr %s392, 2
          %s394 = smul.addr %s393, 8
          %s395 = scalar_lea.vmem %s0, %s394
        $region24: #{gemma_forward.1} parent=19 // pred_fallthru
          _
        // Predicated region
        $region25: #{gemma_forward.1} parent=19 // pred_check
          %p396 = pneg %p79
        $region26: #{gemma_forward.1} parent=19 // pred_check_branch
          %398 = sbr.rel (%p396) target = $region28
        $region27: #{gemma_forward.1} parent=19 // pred_region
          %p399 = scmp.lt.s32.totalorder %s28, 1
          %s400 = scalar_select %p399, %s28, 1
          %s401 = scalar_lea.vmem %s1, %s400
        $region28: #{gemma_forward.1} parent=19 // pred_fallthru
          _
        // Predicated region
        $region29: #{gemma_forward.1} parent=19 // pred_check
          %p402 = pneg %p105
        $region30: #{gemma_forward.1} parent=19 // pred_check_branch
          %404 = sbr.rel (%p402) target = $region32
        $region31: #{gemma_forward.1} parent=19 // pred_region
          %p405 = scmp.lt.s32.totalorder %s29, 1
          %s406 = scalar_select %p405, %s29, 1
          %s407 = scalar_lea.vmem %s2, %s406
        $region32: #{gemma_forward.1} parent=19 // pred_fallthru
          _
        // Predicated region
        $region33: #{gemma_forward.1} parent=19 // pred_check
          %p408 = pneg %p131
        $region34: #{gemma_forward.1} parent=19 // pred_check_branch
          %410 = sbr.rel (%p408) target = $region36
        $region35: #{gemma_forward.1} parent=19 // pred_region
          %p411 = scmp.lt.s32.totalorder %s29, 1
          %s412 = scalar_select %p411, %s29, 1
          %s413 = smul.addr %s412, 4
          %s414 = smul.addr %s413, 4
          %s415 = scalar_lea.vmem %s3, %s414
        $region36: #{gemma_forward.1} parent=19 // pred_fallthru
          _
        // Predicated region
        $region37: #{gemma_forward.1} parent=19 // pred_check
          %p416 = pneg %p157
        $region38: #{gemma_forward.1} parent=19 // pred_check_branch
          %418 = sbr.rel (%p416) target = $region40
        $region39: #{gemma_forward.1} parent=19 // pred_region
          %p419 = scmp.lt.s32.totalorder %s29, 1
          %s420 = scalar_select %p419, %s29, 1
          %s421 = smul.addr %s420, 4
          %s422 = smul.addr %s421, 4
          %s423 = scalar_lea.vmem %s4, %s422
        $region40: #{gemma_forward.1} parent=19 // pred_fallthru
          _
        // Predicated region
        $region41: #{gemma_forward.1} parent=19 // pred_check
          %p424 = pneg %p183
        $region42: #{gemma_forward.1} parent=19 // pred_check_branch
          %426 = sbr.rel (%p424) target = $region44
        $region43: #{gemma_forward.1} parent=19 // pred_region
          %p427 = scmp.lt.s32.totalorder %s29, 1
          %s428 = scalar_select %p427, %s29, 1
          %s429 = smul.addr %s428, 4
          %s430 = smul.addr %s429, 4
          %s431 = scalar_lea.vmem %s5, %s430
        $region44: #{gemma_forward.1} parent=19 // pred_fallthru
          _
        // Predicated region
        $region45: #{gemma_forward.1} parent=19 // pred_check
          %p432 = pneg %p209
        $region46: #{gemma_forward.1} parent=19 // pred_check_branch
          %434 = sbr.rel (%p432) target = $region48
        $region47: #{gemma_forward.1} parent=19 // pred_region
          %p435 = scmp.lt.s32.totalorder %s29, 1
          %s436 = scalar_select %p435, %s29, 1
          %s437 = smul.addr %s436, 4
          %s438 = smul.addr %s437, 4
          %s439 = scalar_lea.vmem %s6, %s438
        $region48: #{gemma_forward.1} parent=19 // pred_fallthru
          _
        // Predicated region
        $region49: #{gemma_forward.1} parent=19 // pred_check
          %p440 = pneg %p235
        $region50: #{gemma_forward.1} parent=19 // pred_check_branch
          %442 = sbr.rel (%p440) target = $region52
        $region51: #{gemma_forward.1} parent=19 // pred_region
          %p443 = scmp.lt.s32.totalorder %s29, 1
          %s444 = scalar_select %p443, %s29, 1
          %s445 = scalar_lea.vmem %s7, %s444
        $region52: #{gemma_forward.1} parent=19 // pred_fallthru
          _
        // Predicated region
        $region53: #{gemma_forward.1} parent=19 // pred_check
          %p446 = pneg %p261
        $region54: #{gemma_forward.1} parent=19 // pred_check_branch
          %448 = sbr.rel (%p446) target = $region56
        $region55: #{gemma_forward.1} parent=19 // pred_region
          %p449 = scmp.lt.s32.totalorder %s29, 1
          %s450 = scalar_select %p449, %s29, 1
          %s451 = smul.addr %s450, 4
          %s452 = smul.addr %s451, 4
          %s453 = scalar_lea.vmem %s8, %s452
        $region56: #{gemma_forward.1} parent=19 // pred_fallthru
          _
        // Predicated region
        $region57: #{gemma_forward.1} parent=19 // pred_check
          %p454 = pneg %p287
        $region58: #{gemma_forward.1} parent=19 // pred_check_branch
          %456 = sbr.rel (%p454) target = $region60
        $region59: #{gemma_forward.1} parent=19 // pred_region
          %p457 = scmp.lt.s32.totalorder %s29, 1
          %s458 = scalar_select %p457, %s29, 1
          %s459 = smul.addr %s458, 4
          %s460 = smul.addr %s459, 4
          %s461 = scalar_lea.vmem %s9, %s460
        $region60: #{gemma_forward.1} parent=19 // pred_fallthru
          _
        // Predicated region
        $region61: #{gemma_forward.1} parent=19 // pred_check
          %p462 = pneg %p313
        $region62: #{gemma_forward.1} parent=19 // pred_check_branch
          %464 = sbr.rel (%p462) target = $region64
        $region63: #{gemma_forward.1} parent=19 // pred_region
          %p465 = scmp.lt.s32.totalorder %s29, 1
          %s466 = scalar_select %p465, %s29, 1
          %s467 = smul.addr %s466, 8
          %s468 = smul.addr %s467, 4
          %s469 = scalar_lea.vmem %s10, %s468
        $region64: #{gemma_forward.1} parent=19 // pred_fallthru
          _
      $region20: #{gemma_forward.1} parent=5 // pred_fallthru
        _
      %p470 = scmp.le.s32.totalorder 1, %s21
      %p471 = scmp.lt.s32.totalorder %s21, 5
      %p472 = pnand %p470, %p471
      %p473 = pneg %p472
      // Predicated region
      $region65: #{gemma_forward.1} parent=5 // pred_check
        _
      $region66: #{gemma_forward.1} parent=5 // pred_check_branch
        %475 = sbr.rel (%p472) target = $region68
      $region67: #{gemma_forward.1} parent=5 // pred_region
        %s476 = ssub.s32 %s21, 1
        %p477 = scmp.lt.s32.totalorder %s30, 1
        %s478 = scalar_select %p477, %s30, 1
        %s479 = smul.addr %s478, 2
        %s480 = smul.addr %s479, 8
        %s481 = scalar_lea.vmem %s0, %s480
        %p482 = pneg %p59
        %p483 = pneg %p56
        %p484 = scmp.lt.s32.totalorder %s30, 1
        %s485 = scalar_select %p484, %s30, 1
        %s486 = scalar_lea.vmem %s1, %s485
        %p487 = pneg %p85
        %p488 = pneg %p82
        %p489 = scmp.lt.s32.totalorder %s31, 1
        %s490 = scalar_select %p489, %s31, 1
        %s491 = scalar_lea.vmem %s2, %s490
        %p492 = pneg %p111
        %p493 = pneg %p108
        %p494 = scmp.lt.s32.totalorder %s31, 1
        %s495 = scalar_select %p494, %s31, 1
        %s496 = smul.addr %s495, 4
        %s497 = smul.addr %s496, 4
        %s498 = scalar_lea.vmem %s3, %s497
        %p499 = pneg %p137
        %p500 = pneg %p134
        %p501 = scmp.lt.s32.totalorder %s31, 1
        %s502 = scalar_select %p501, %s31, 1
        %s503 = smul.addr %s502, 4
        %s504 = smul.addr %s503, 4
        %s505 = scalar_lea.vmem %s4, %s504
        %p506 = pneg %p163
        %p507 = pneg %p160
        %p508 = scmp.lt.s32.totalorder %s31, 1
        %s509 = scalar_select %p508, %s31, 1
        %s510 = smul.addr %s509, 4
        %s511 = smul.addr %s510, 4
        %s512 = scalar_lea.vmem %s5, %s511
        %p513 = pneg %p189
        %p514 = pneg %p186
        %p515 = scmp.lt.s32.totalorder %s31, 1
        %s516 = scalar_select %p515, %s31, 1
        %s517 = smul.addr %s516, 4
        %s518 = smul.addr %s517, 4
        %s519 = scalar_lea.vmem %s6, %s518
        %p520 = pneg %p215
        %p521 = pneg %p212
        %p522 = scmp.lt.s32.totalorder %s31, 1
        %s523 = scalar_select %p522, %s31, 1
        %s524 = scalar_lea.vmem %s7, %s523
        %p525 = pneg %p241
        %p526 = pneg %p238
        %p527 = scmp.lt.s32.totalorder %s31, 1
        %s528 = scalar_select %p527, %s31, 1
        %s529 = smul.addr %s528, 4
        %s530 = smul.addr %s529, 4
        %s531 = scalar_lea.vmem %s8, %s530
        %p532 = pneg %p267
        %p533 = pneg %p264
        %p534 = scmp.lt.s32.totalorder %s31, 1
        %s535 = scalar_select %p534, %s31, 1
        %s536 = smul.addr %s535, 4
        %s537 = smul.addr %s536, 4
        %s538 = scalar_lea.vmem %s9, %s537
        %p539 = pneg %p293
        %p540 = pneg %p290
        %p541 = scmp.lt.s32.totalorder %s31, 1
        %s542 = scalar_select %p541, %s31, 1
        %s543 = smul.addr %s542, 8
        %s544 = smul.addr %s543, 4
        %s545 = scalar_lea.vmem %s10, %s544
        %p546 = pneg %p319
        %p547 = pneg %p316
        %p548 = pneg %p340
        %p549 = pneg %p337
        %p550 = pneg %p366
        %p551 = pneg %p363
        %s552 = sand.u32 %s353, 1
        %s553 = scalar_lea.sflag [#allocation4], %s552
        %s554 = sand.u32 %s353, 1
        %s555 = smul.addr %s554, 16
        %s556 = scalar_lea.vmem [#allocation3], %s555
        %p557 = scmp.lt.s32.totalorder %s30, 1
        %s558 = scalar_select %p557, %s30, 1
        %s559 = smul.addr %s558, 2
        %s560 = smul.addr %s559, 8
        %s561 = scalar_lea.vmem %s0, %s560
        %p562 = scmp.lt.s32.totalorder %s30, 1
        %s563 = scalar_select %p562, %s30, 1
        %s564 = scalar_lea.vmem %s1, %s563
        %p565 = scmp.lt.s32.totalorder %s31, 1
        %s566 = scalar_select %p565, %s31, 1
        %s567 = scalar_lea.vmem %s2, %s566
        %p568 = scmp.lt.s32.totalorder %s31, 1
        %s569 = scalar_select %p568, %s31, 1
        %s570 = smul.addr %s569, 4
        %s571 = smul.addr %s570, 4
        %s572 = scalar_lea.vmem %s3, %s571
        %p573 = scmp.lt.s32.totalorder %s31, 1
        %s574 = scalar_select %p573, %s31, 1
        %s575 = smul.addr %s574, 4
        %s576 = smul.addr %s575, 4
        %s577 = scalar_lea.vmem %s4, %s576
        %p578 = scmp.lt.s32.totalorder %s31, 1
        %s579 = scalar_select %p578, %s31, 1
        %s580 = smul.addr %s579, 4
        %s581 = smul.addr %s580, 4
        %s582 = scalar_lea.vmem %s5, %s581
        %p583 = scmp.lt.s32.totalorder %s31, 1
        %s584 = scalar_select %p583, %s31, 1
        %s585 = smul.addr %s584, 4
        %s586 = smul.addr %s585, 4
        %s587 = scalar_lea.vmem %s6, %s586
        %p588 = scmp.lt.s32.totalorder %s31, 1
        %s589 = scalar_select %p588, %s31, 1
        %s590 = scalar_lea.vmem %s7, %s589
        %p591 = scmp.lt.s32.totalorder %s31, 1
        %s592 = scalar_select %p591, %s31, 1
        %s593 = smul.addr %s592, 4
        %s594 = smul.addr %s593, 4
        %s595 = scalar_lea.vmem %s8, %s594
        %p596 = scmp.lt.s32.totalorder %s31, 1
        %s597 = scalar_select %p596, %s31, 1
        %s598 = smul.addr %s597, 4
        %s599 = smul.addr %s598, 4
        %s600 = scalar_lea.vmem %s9, %s599
        %p601 = scmp.lt.s32.totalorder %s31, 1
        %s602 = scalar_select %p601, %s31, 1
        %s603 = smul.addr %s602, 8
        %s604 = smul.addr %s603, 4
        %s605 = scalar_lea.vmem %s10, %s604
        %p607 = scmp.eq.s32.totalorder %s31, 0
        // Predicated region
        $region69: #{gemma_forward.1} parent=67 // pred_check
          %p608 = pneg %p607
        $region70: #{gemma_forward.1} parent=67 // pred_check_branch
          %610 = sbr.rel (%p608) target = $region72
        $region71: #{gemma_forward.1} parent=67 // pred_region
          %v611 = vld [vmem:[%s561] sm:$0xff]
          %v612 = vld [vmem:[%s561 + $0x8] sm:$0xff]
          %vm613 = vcmask 261120
          %614 = vst.msk [vmem:[#allocation2] sm:$0xff] %vm613, %v611
          %615 = vst.msk [vmem:[#allocation2 + $0x8] sm:$0xff] %vm613, %v612
        $region72: #{gemma_forward.1} parent=67 // pred_fallthru
          _
        %v616 = vld [vmem:[#allocation2] sm:$0xff]
        %v617 = vld [vmem:[#allocation2 + $0x8] sm:$0xff]
        %v618 = vlaneseq
        %v619 = vshrl.u32 %v618, 7
        %v620 = vadd.s32 %v619, 8
        %v621 = vlaneseq
        %v622 = vand.u32 %v621, 127
        %v623 = vld [vmem:[%s564] sm:$0x1]
        %vm624 = vcmp.gt.f32.partialorder %v623, 0.5
        %vm625 = vcmp.le.s32.totalorder %v622, %v619
        %vm626 = vcmp.le.s32.totalorder %v622, %v620
        %v627 = vsel %vm624, 1, 0
        %v628 = vperm.slane %v627, 0
        %vm629 = vcmp.eq.s32.totalorder %v628, 1
        %vm630 = vmand %vm625, %vm629
        %vm631 = vmand %vm626, %vm629
        %v632 = vsel %vm630, 0.0, -1e+09
        %v633 = vsel %vm631, 0.0, -1e+09
        %v634 = vld [vmem:[%s567] sm:$0x1]
        %v635 = vmul.f32 %v616, %v616
        %v636 = vmul.f32 %v617, %v617
        %vm637 = vcmask 261120
        %v638 = vsel %vm637, %v635, 0.0
        %639 = vadd.xlane.f32.xlu0 %v638
        %v640 = vpop.xlane.xlu0 %639
        %v641 = vsel %vm637, %v636, 0.0
        %642 = vadd.xlane.f32.xlu0 %v641
        %v643 = vpop.xlane.xlu0 %642
        %v644 = vrcp.pop 32.0
        %v645 = vmul.f32 32.0, %v644
        %v646 = vsub.f32 1.0, %v645
        %v647 = vmul.f32 %v644, %v646
        %v648 = vadd.f32 %v644, %v647
        %vm649 = vweird.f32 %v644
        %v650 = vsel %vm649, %v644, %v648
        %v651 = vmul.f32 %v640, %v650
        %v652 = vmul.f32 %v643, %v650
        %v653 = vadd.f32 %v651, 1e-06
        %v654 = vadd.f32 %v652, 1e-06
        %v655 = vrsqrt.pop %v653
        %v656 = vmul.f32 %v655, %v653
        %v657 = vmul.f32 %v656, %v655
        %v658 = vmul.f32 0.5, %v657
        %v659 = vsub.f32 1.5, %v658
        %v660 = vmul.f32 %v655, %v659
        %vm661 = vweird.f32 %v653
        %vm662 = vweird.f32 %v655
        %vm663 = vmor %vm661, %vm662
        %v664 = vsel %vm663, %v655, %v660
        %v665 = vrsqrt.pop %v654
        %v666 = vmul.f32 %v665, %v654
        %v667 = vmul.f32 %v666, %v665
        %v668 = vmul.f32 0.5, %v667
        %v669 = vsub.f32 1.5, %v668
        %v670 = vmul.f32 %v665, %v669
        %vm671 = vweird.f32 %v654
        %vm672 = vweird.f32 %v665
        %vm673 = vmor %vm671, %vm672
        %v674 = vsel %vm673, %v665, %v670
        %v675 = vmul.f32 %v616, %v664
        %v676 = vmul.f32 %v617, %v674
        %v677 = vadd.f32 %v634, 1.0
        %v679 = vperm.slane %v677, 0
        %v681 = vmul.f32 %v675, %v679
        %v682 = vmul.f32 %v676, %v679
        %v683 = vpack.c.bf16 %v682, %v681
        %v684 = vld [vmem:[%s572] sm:$0xf]
        %v685 = vld [vmem:[%s572 + $0x4] sm:$0xf]
        %v686 = vld [vmem:[%s572 + $0x8] sm:$0xf]
        %v687 = vld [vmem:[%s572 + $0xc] sm:$0xf]
        %v692 = vunpack.c.l.b16 %v684
        %v693 = vunpack.c.l.b16 %v685
        %v694 = vunpack.c.l.b16 %v686
        %v695 = vunpack.c.l.b16 %v687
        %v696 = vpack.c.b16 %v693, %v692
        %v697 = vpack.c.b16 %v695, %v694
        %v701 = vsel %vm637, %v683, 0
        %703 = vmatpush.bf16.msra.mxu0 0
        %704 = vmatpush.bf16.msra.mxu0 0
        %705 = vmatpush.bf16.msra.mxu0 0
        %706 = vmatpush.bf16.msra.mxu0 0
        %707 = vmatpush.bf16.msra.mxu0 0
        %708 = vmatpush.bf16.msra.mxu0 0
        %709 = vmatpush.bf16.msra.mxu0 %v697
        %710 = vmatpush.bf16.msra.mxu0 %v696
        %711 = vmatmul.bf16.gmra.mxu0 %v701
        %v712 = vpop.f32.mrf.mxu0
        %v713 = vadd.f32 0.0, %v712
        %v714 = vpop.f32.mrf.mxu0
        %v715 = vadd.f32 0.0, %v714
        %716 = vdwg.mxu0
        %v717 = vld [vmem:[%s577] sm:$0xf]
        %v718 = vld [vmem:[%s577 + $0x4] sm:$0xf]
        %v719 = vld [vmem:[%s577 + $0x8] sm:$0xf]
        %v720 = vld [vmem:[%s577 + $0xc] sm:$0xf]
        %v725 = vunpack.c.l.b16 %v717
        %v726 = vunpack.c.l.b16 %v718
        %v727 = vunpack.c.l.b16 %v719
        %v728 = vunpack.c.l.b16 %v720
        %v729 = vpack.c.b16 %v726, %v725
        %v730 = vpack.c.b16 %v728, %v727
        %733 = vmatpush.bf16.msra.mxu0 0
        %734 = vmatpush.bf16.msra.mxu0 0
        %735 = vmatpush.bf16.msra.mxu0 0
        %736 = vmatpush.bf16.msra.mxu0 0
        %737 = vmatpush.bf16.msra.mxu0 0
        %738 = vmatpush.bf16.msra.mxu0 0
        %739 = vmatpush.bf16.msra.mxu0 %v730
        %740 = vmatpush.bf16.msra.mxu0 %v729
        %741 = vmatmul.bf16.gmra.mxu0 %v701
        %v742 = vpop.f32.mrf.mxu0
        %v743 = vadd.f32 0.0, %v742
        %v744 = vpop.f32.mrf.mxu0
        %v745 = vadd.f32 0.0, %v744
        %746 = vdwg.mxu0
        %v747 = vld [vmem:[%s582] sm:$0xf]
        %v748 = vld [vmem:[%s582 + $0x4] sm:$0xf]
        %v749 = vld [vmem:[%s582 + $0x8] sm:$0xf]
        %v750 = vld [vmem:[%s582 + $0xc] sm:$0xf]
        %v755 = vunpack.c.l.b16 %v747
        %v756 = vunpack.c.l.b16 %v748
        %v757 = vunpack.c.l.b16 %v749
        %v758 = vunpack.c.l.b16 %v750
        %v759 = vpack.c.b16 %v756, %v755
        %v760 = vpack.c.b16 %v758, %v757
        %763 = vmatpush.bf16.msra.mxu0 0
        %764 = vmatpush.bf16.msra.mxu0 0
        %765 = vmatpush.bf16.msra.mxu0 0
        %766 = vmatpush.bf16.msra.mxu0 0
        %767 = vmatpush.bf16.msra.mxu0 0
        %768 = vmatpush.bf16.msra.mxu0 0
        %769 = vmatpush.bf16.msra.mxu0 %v760
        %770 = vmatpush.bf16.msra.mxu0 %v759
        %771 = vmatmul.bf16.gmra.mxu0 %v701
        %v772 = vpop.f32.mrf.mxu0
        %v773 = vadd.f32 0.0, %v772
        %v774 = vpop.f32.mrf.mxu0
        %v775 = vadd.f32 0.0, %v774
        %776 = vdwg.mxu0
        %779 = vrot.lane.b32.xlu0 %v713, 112
        %v780 = vpop.permute.xlu0 %779
        %781 = vrot.lane.b32.xlu0 %v715, 112
        %v782 = vpop.permute.xlu0 %781
        %v785 = vpack.c.bf16 %v713, %v713
        %v786 = vpack.c.bf16 %v715, %v715
        %v787 = vpack.c.bf16 %v780, %v780
        %v788 = vpack.c.bf16 %v782, %v782
        %791 = vrot.lane.b32.xlu0 %v743, 112
        %v792 = vpop.permute.xlu0 %791
        %793 = vrot.lane.b32.xlu0 %v745, 112
        %v794 = vpop.permute.xlu0 %793
        %v797 = vpack.c.bf16 %v743, %v743
        %v798 = vpack.c.bf16 %v745, %v745
        %v799 = vpack.c.bf16 %v792, %v792
        %v800 = vpack.c.bf16 %v794, %v794
        %803 = vrot.lane.b32.xlu0 %v773, 112
        %v804 = vpop.permute.xlu0 %803
        %805 = vrot.lane.b32.xlu0 %v775, 112
        %v806 = vpop.permute.xlu0 %805
        %v809 = vpack.c.bf16 %v773, %v773
        %v810 = vpack.c.bf16 %v775, %v775
        %v811 = vpack.c.bf16 %v804, %v804
        %v812 = vpack.c.bf16 %v806, %v806
        %v815 = vunpack.c.l.b16 %v785
        %v816 = vunpack.c.l.b16 %v786
        %v817 = vpack.c.b16 %v816, %v815
        %v820 = vunpack.c.l.b16 %v797
        %v821 = vunpack.c.l.b16 %v798
        %v822 = vpack.c.b16 %v821, %v820
        %vm823 = vcmask 130048
        %v825 = vsel %vm823, %v817, 0
        %v828 = vsel %vm823, %v822, 0
        %830 = vmatpush.bf16.xpose.msra.mxu0 0
        %831 = vmatpush.bf16.xpose.msra.mxu0 0
        %832 = vmatpush.bf16.xpose.msra.mxu0 0
        %833 = vmatpush.bf16.xpose.msra.mxu0 0
        %834 = vmatpush.bf16.xpose.msra.mxu0 0
        %835 = vmatpush.bf16.xpose.msra.mxu0 0
        %836 = vmatpush.bf16.xpose.msra.mxu0 0
        %837 = vmatpush.bf16.xpose.msra.mxu0 %v828
        %838 = vmatmul.bf16.gmra.mxu0 %v825
        %v839 = vpop.f32.mrf.mxu0
        %v840 = vadd.f32 %v632, %v839
        %v841 = vpop.f32.mrf.mxu0
        %v842 = vadd.f32 %v633, %v841
        %843 = vdwg.mxu0
        %v846 = vunpack.c.l.b16 %v787
        %v847 = vunpack.c.l.b16 %v788
        %v848 = vpack.c.b16 %v847, %v846
        %v851 = vunpack.c.l.b16 %v799
        %v852 = vunpack.c.l.b16 %v800
        %v853 = vpack.c.b16 %v852, %v851
        %v855 = vsel %vm823, %v848, 0
        %v858 = vsel %vm823, %v853, 0
        %860 = vmatpush.bf16.xpose.msra.mxu0 0
        %861 = vmatpush.bf16.xpose.msra.mxu0 0
        %862 = vmatpush.bf16.xpose.msra.mxu0 0
        %863 = vmatpush.bf16.xpose.msra.mxu0 0
        %864 = vmatpush.bf16.xpose.msra.mxu0 0
        %865 = vmatpush.bf16.xpose.msra.mxu0 0
        %866 = vmatpush.bf16.xpose.msra.mxu0 0
        %867 = vmatpush.bf16.xpose.msra.mxu0 %v858
        %868 = vmatmul.bf16.gmra.mxu0 %v855
        %v869 = vpop.f32.mrf.mxu0
        %v870 = vadd.f32 %v632, %v869
        %v871 = vpop.f32.mrf.mxu0
        %v872 = vadd.f32 %v633, %v871
        %873 = vdwg.mxu0
        %v874 = vsel %vm823, %v840, -inf
        %875 = vmax.xlane.f32.xlu0 %v874
        %v876 = vpop.xlane.xlu0 %875
        %v877 = vsel %vm823, %v842, -inf
        %878 = vmax.xlane.f32.xlu0 %v877
        %v879 = vpop.xlane.xlu0 %878
        %v880 = vsel %vm823, %v870, -inf
        %881 = vmax.xlane.f32.xlu0 %v880
        %v882 = vpop.xlane.xlu0 %881
        %v883 = vsel %vm823, %v872, -inf
        %884 = vmax.xlane.f32.xlu0 %v883
        %v885 = vpop.xlane.xlu0 %884
        %v886 = vsub.f32 %v840, %v876
        %v887 = vsub.f32 %v842, %v879
        %v888 = vsub.f32 %v870, %v882
        %v889 = vsub.f32 %v872, %v885
        %v890 = vmul.f32 %v886, 1.442695
        %v891 = vpow.pop %v890
        %v892 = vmul.f32 %v887, 1.442695
        %v893 = vpow.pop %v892
        %v894 = vmul.f32 %v888, 1.442695
        %v895 = vpow.pop %v894
        %v896 = vmul.f32 %v889, 1.442695
        %v897 = vpow.pop %v896
        %v898 = vsel %vm823, %v891, 0.0
        %899 = vadd.xlane.f32.xlu0 %v898
        %v900 = vpop.xlane.xlu0 %899
        %v901 = vsel %vm823, %v893, 0.0
        %902 = vadd.xlane.f32.xlu0 %v901
        %v903 = vpop.xlane.xlu0 %902
        %v904 = vsel %vm823, %v895, 0.0
        %905 = vadd.xlane.f32.xlu0 %v904
        %v906 = vpop.xlane.xlu0 %905
        %v907 = vsel %vm823, %v897, 0.0
        %908 = vadd.xlane.f32.xlu0 %v907
        %v909 = vpop.xlane.xlu0 %908
        %v910 = vrcp.pop %v900
        %v911 = vrcp.pop %v903
        %v912 = vrcp.pop %v906
        %v913 = vrcp.pop %v909
        %v914 = vmul.f32 %v891, %v910
        %v915 = vmul.f32 %v893, %v911
        %v916 = vmul.f32 %v895, %v912
        %v917 = vmul.f32 %v897, %v913
        %v918 = vpack.c.bf16 %v914, %v914
        %v919 = vpack.c.bf16 %v915, %v915
        %v920 = vpack.c.bf16 %v916, %v916
        %v921 = vpack.c.bf16 %v917, %v917
        %v924 = vunpack.c.l.b16 %v918
        %v925 = vunpack.c.l.b16 %v919
        %v926 = vpack.c.b16 %v925, %v924
        %v929 = vunpack.c.l.b16 %v809
        %v930 = vunpack.c.l.b16 %v810
        %v931 = vpack.c.b16 %v930, %v929
        %v934 = vsel %vm823, %v926, 0
        %936 = vmatpush.bf16.msra.mxu0 0
        %937 = vmatpush.bf16.msra.mxu0 0
        %938 = vmatpush.bf16.msra.mxu0 0
        %939 = vmatpush.bf16.msra.mxu0 0
        %940 = vmatpush.bf16.msra.mxu0 0
        %941 = vmatpush.bf16.msra.mxu0 0
        %942 = vmatpush.bf16.msra.mxu0 0
        %943 = vmatpush.bf16.msra.mxu0 %v931
        %944 = vmatmul.bf16.gmra.mxu0 %v934
        %v945 = vpop.f32.mrf.mxu0
        %v946 = vadd.f32 0.0, %v945
        %v947 = vpop.f32.mrf.mxu0
        %v948 = vadd.f32 0.0, %v947
        %949 = vdwg.mxu0
        %v952 = vunpack.c.l.b16 %v920
        %v953 = vunpack.c.l.b16 %v921
        %v954 = vpack.c.b16 %v953, %v952
        %v957 = vunpack.c.l.b16 %v811
        %v958 = vunpack.c.l.b16 %v812
        %v959 = vpack.c.b16 %v958, %v957
        %v962 = vsel %vm823, %v954, 0
        %964 = vmatpush.bf16.msra.mxu0 0
        %965 = vmatpush.bf16.msra.mxu0 0
        %966 = vmatpush.bf16.msra.mxu0 0
        %967 = vmatpush.bf16.msra.mxu0 0
        %968 = vmatpush.bf16.msra.mxu0 0
        %969 = vmatpush.bf16.msra.mxu0 0
        %970 = vmatpush.bf16.msra.mxu0 0
        %971 = vmatpush.bf16.msra.mxu0 %v959
        %972 = vmatmul.bf16.gmra.mxu0 %v962
        %v973 = vpop.f32.mrf.mxu0
        %v974 = vadd.f32 0.0, %v973
        %v975 = vpop.f32.mrf.mxu0
        %v976 = vadd.f32 0.0, %v975
        %977 = vdwg.mxu0
        %980 = vrot.lane.b32.xlu0 %v974, 16
        %v981 = vpop.permute.xlu0 %980
        %982 = vrot.lane.b32.xlu0 %v976, 16
        %v983 = vpop.permute.xlu0 %982
        %v986 = vsel %vm823, %v946, %v981
        %v987 = vsel %vm823, %v948, %v983
        %v988 = vpack.c.bf16 %v987, %v986
        %v989 = vld [vmem:[%s587] sm:$0xf]
        %v990 = vld [vmem:[%s587 + $0x4] sm:$0xf]
        %v991 = vld [vmem:[%s587 + $0x8] sm:$0xf]
        %v992 = vld [vmem:[%s587 + $0xc] sm:$0xf]
        %v997 = vunpack.c.l.b16 %v989
        %v998 = vunpack.c.l.b16 %v990
        %v999 = vunpack.c.l.b16 %v991
        %v1000 = vunpack.c.l.b16 %v992
        %v1001 = vpack.c.b16 %v998, %v997
        %v1002 = vpack.c.b16 %v1000, %v999
        %v1006 = vsel %vm637, %v988, 0
        %1008 = vmatpush.bf16.msra.mxu0 0
        %1009 = vmatpush.bf16.msra.mxu0 0
        %1010 = vmatpush.bf16.msra.mxu0 0
        %1011 = vmatpush.bf16.msra.mxu0 0
        %1012 = vmatpush.bf16.msra.mxu0 0
        %1013 = vmatpush.bf16.msra.mxu0 0
        %1014 = vmatpush.bf16.msra.mxu0 %v1002
        %1015 = vmatpush.bf16.msra.mxu0 %v1001
        %1016 = vmatmul.bf16.gmra.mxu0 %v1006
        %v1017 = vpop.f32.mrf.mxu0
        %v1018 = vadd.f32 0.0, %v1017
        %v1019 = vpop.f32.mrf.mxu0
        %v1020 = vadd.f32 0.0, %v1019
        %1021 = vdwg.mxu0
        %v1022 = vadd.f32 %v616, %v1018
        %v1023 = vadd.f32 %v617, %v1020
        %v1024 = vld [vmem:[%s590] sm:$0x1]
        %v1025 = vmul.f32 %v1022, %v1022
        %v1026 = vmul.f32 %v1023, %v1023
        %v1027 = vsel %vm637, %v1025, 0.0
        %1028 = vadd.xlane.f32.xlu0 %v1027
        %v1029 = vpop.xlane.xlu0 %1028
        %v1030 = vsel %vm637, %v1026, 0.0
        %1031 = vadd.xlane.f32.xlu0 %v1030
        %v1032 = vpop.xlane.xlu0 %1031
        %v1033 = vmul.f32 %v1029, %v650
        %v1034 = vmul.f32 %v1032, %v650
        %v1035 = vadd.f32 %v1033, 1e-06
        %v1036 = vadd.f32 %v1034, 1e-06
        %v1037 = vrsqrt.pop %v1035
        %v1038 = vmul.f32 %v1037, %v1035
        %v1039 = vmul.f32 %v1038, %v1037
        %v1040 = vmul.f32 0.5, %v1039
        %v1041 = vsub.f32 1.5, %v1040
        %v1042 = vmul.f32 %v1037, %v1041
        %vm1043 = vweird.f32 %v1035
        %vm1044 = vweird.f32 %v1037
        %vm1045 = vmor %vm1043, %vm1044
        %v1046 = vsel %vm1045, %v1037, %v1042
        %v1047 = vrsqrt.pop %v1036
        %v1048 = vmul.f32 %v1047, %v1036
        %v1049 = vmul.f32 %v1048, %v1047
        %v1050 = vmul.f32 0.5, %v1049
        %v1051 = vsub.f32 1.5, %v1050
        %v1052 = vmul.f32 %v1047, %v1051
        %vm1053 = vweird.f32 %v1036
        %vm1054 = vweird.f32 %v1047
        %vm1055 = vmor %vm1053, %vm1054
        %v1056 = vsel %vm1055, %v1047, %v1052
        %v1057 = vmul.f32 %v1022, %v1046
        %v1058 = vmul.f32 %v1023, %v1056
        %v1059 = vadd.f32 %v1024, 1.0
        %v1061 = vperm.slane %v1059, 0
        %v1063 = vmul.f32 %v1057, %v1061
        %v1064 = vmul.f32 %v1058, %v1061
        %v1065 = vpack.c.bf16 %v1064, %v1063
        %v1066 = vld [vmem:[%s595] sm:$0xf]
        %v1067 = vld [vmem:[%s595 + $0x4] sm:$0xf]
        %v1068 = vld [vmem:[%s595 + $0x8] sm:$0xf]
        %v1069 = vld [vmem:[%s595 + $0xc] sm:$0xf]
        %v1074 = vunpack.c.l.b16 %v1066
        %v1075 = vunpack.c.l.b16 %v1067
        %v1076 = vunpack.c.l.b16 %v1068
        %v1077 = vunpack.c.l.b16 %v1069
        %v1078 = vpack.c.b16 %v1075, %v1074
        %v1079 = vpack.c.b16 %v1077, %v1076
        %v1083 = vsel %vm637, %v1065, 0
        %1085 = vmatpush.bf16.msra.mxu0 0
        %1086 = vmatpush.bf16.msra.mxu0 0
        %1087 = vmatpush.bf16.msra.mxu0 0
        %1088 = vmatpush.bf16.msra.mxu0 0
        %1089 = vmatpush.bf16.msra.mxu0 0
        %1090 = vmatpush.bf16.msra.mxu0 0
        %1091 = vmatpush.bf16.msra.mxu0 %v1079
        %1092 = vmatpush.bf16.msra.mxu0 %v1078
        %1093 = vmatmul.bf16.gmra.mxu0 %v1083
        %v1094 = vpop.f32.mrf.mxu0
        %v1095 = vadd.f32 0.0, %v1094
        %v1096 = vpop.f32.mrf.mxu0
        %v1097 = vadd.f32 0.0, %v1096
        %1098 = vdwg.mxu0
        %v1099 = vmul.f32 %v1095, %v1095
        %v1100 = vmul.f32 %v1097, %v1097
        %v1101 = vmul.f32 %v1095, %v1099
        %v1102 = vmul.f32 %v1097, %v1100
        %v1103 = vmul.f32 %v1101, 0.044715
        %v1104 = vmul.f32 %v1102, 0.044715
        %v1105 = vadd.f32 %v1095, %v1103
        %v1106 = vadd.f32 %v1097, %v1104
        %v1107 = vmul.f32 %v1105, 0.7978846
        %v1108 = vmul.f32 %v1106, 0.7978846
        %v1109 = vtanh.pop %v1107
        %v1110 = vtanh.pop %v1108
        %v1111 = vadd.f32 %v1109, 1.0
        %v1112 = vadd.f32 %v1110, 1.0
        %v1113 = vmul.f32 %v1111, 0.5
        %v1114 = vmul.f32 %v1112, 0.5
        %v1115 = vmul.f32 %v1095, %v1113
        %v1116 = vmul.f32 %v1097, %v1114
        %v1117 = vld [vmem:[%s600] sm:$0xf]
        %v1118 = vld [vmem:[%s600 + $0x4] sm:$0xf]
        %v1119 = vld [vmem:[%s600 + $0x8] sm:$0xf]
        %v1120 = vld [vmem:[%s600 + $0xc] sm:$0xf]
        %v1125 = vunpack.c.l.b16 %v1117
        %v1126 = vunpack.c.l.b16 %v1118
        %v1127 = vunpack.c.l.b16 %v1119
        %v1128 = vunpack.c.l.b16 %v1120
        %v1129 = vpack.c.b16 %v1126, %v1125
        %v1130 = vpack.c.b16 %v1128, %v1127
        %1133 = vmatpush.bf16.msra.mxu0 0
        %1134 = vmatpush.bf16.msra.mxu0 0
        %1135 = vmatpush.bf16.msra.mxu0 0
        %1136 = vmatpush.bf16.msra.mxu0 0
        %1137 = vmatpush.bf16.msra.mxu0 0
        %1138 = vmatpush.bf16.msra.mxu0 0
        %1139 = vmatpush.bf16.msra.mxu0 %v1130
        %1140 = vmatpush.bf16.msra.mxu0 %v1129
        %1141 = vmatmul.bf16.gmra.mxu0 %v1083
        %v1142 = vpop.f32.mrf.mxu0
        %v1143 = vadd.f32 0.0, %v1142
        %v1144 = vpop.f32.mrf.mxu0
        %v1145 = vadd.f32 0.0, %v1144
        %1146 = vdwg.mxu0
        %v1147 = vmul.f32 %v1115, %v1143
        %v1148 = vmul.f32 %v1116, %v1145
        %v1149 = vpack.c.bf16 %v1148, %v1147
        %v1150 = vld [vmem:[%s605] sm:$0xf]
        %v1151 = vld [vmem:[%s605 + $0x4] sm:$0xf]
        %v1152 = vld [vmem:[%s605 + $0x8] sm:$0xf]
        %v1153 = vld [vmem:[%s605 + $0xc] sm:$0xf]
        %v1154 = vld [vmem:[%s605 + $0x10] sm:$0xf]
        %v1155 = vld [vmem:[%s605 + $0x14] sm:$0xf]
        %v1156 = vld [vmem:[%s605 + $0x18] sm:$0xf]
        %v1157 = vld [vmem:[%s605 + $0x1c] sm:$0xf]
        %v1166 = vunpack.c.l.b16 %v1150
        %v1167 = vunpack.c.l.b16 %v1151
        %v1168 = vunpack.c.l.b16 %v1152
        %v1169 = vunpack.c.l.b16 %v1153
        %v1170 = vunpack.c.l.b16 %v1154
        %v1171 = vunpack.c.l.b16 %v1155
        %v1172 = vunpack.c.l.b16 %v1156
        %v1173 = vunpack.c.l.b16 %v1157
        %v1174 = vpack.c.b16 %v1167, %v1166
        %v1175 = vpack.c.b16 %v1169, %v1168
        %v1176 = vpack.c.b16 %v1171, %v1170
        %v1177 = vpack.c.b16 %v1173, %v1172
        %vm1182 = vcmask 523264
        %v1184 = vsel %vm1182, %v1149, 0
        %1186 = vmatpush.bf16.msra.mxu0 0
        %1187 = vmatpush.bf16.msra.mxu0 0
        %1188 = vmatpush.bf16.msra.mxu0 0
        %1189 = vmatpush.bf16.msra.mxu0 0
        %1190 = vmatpush.bf16.msra.mxu0 %v1177
        %1191 = vmatpush.bf16.msra.mxu0 %v1176
        %1192 = vmatpush.bf16.msra.mxu0 %v1175
        %1193 = vmatpush.bf16.msra.mxu0 %v1174
        %1194 = vmatmul.bf16.gmra.mxu0 %v1184
        %v1195 = vpop.f32.mrf.mxu0
        %v1196 = vadd.f32 0.0, %v1195
        %v1197 = vpop.f32.mrf.mxu0
        %v1198 = vadd.f32 0.0, %v1197
        %1199 = vdwg.mxu0
        %v1200 = vadd.f32 %v1022, %v1196
        %v1201 = vadd.f32 %v1023, %v1198
        %1202 = vst.msk [vmem:[#allocation2] sm:$0xff] %vm637, %v1200
        %1203 = vst.msk [vmem:[#allocation2 + $0x8] sm:$0xff] %vm637, %v1201
        %p1204 = scmp.eq.s32.totalorder %s31, 1
        // Predicated region
        $region73: #{gemma_forward.1} parent=67 // pred_check
          %p1205 = pneg %p1204
        $region74: #{gemma_forward.1} parent=67 // pred_check_branch
          %1207 = sbr.rel (%p1205) target = $region76
        $region75: #{gemma_forward.1} parent=67 // pred_region
          %v1208 = vld [vmem:[%s11] sm:$0x1]
          %v1209 = vmul.f32 %v1200, %v1200
          %v1210 = vmul.f32 %v1201, %v1201
          %v1211 = vsel %vm637, %v1209, 0.0
          %1212 = vadd.xlane.f32.xlu0 %v1211
          %v1213 = vpop.xlane.xlu0 %1212
          %v1214 = vsel %vm637, %v1210, 0.0
          %1215 = vadd.xlane.f32.xlu0 %v1214
          %v1216 = vpop.xlane.xlu0 %1215
          %v1217 = vmul.f32 %v1213, %v650
          %v1218 = vmul.f32 %v1216, %v650
          %v1219 = vadd.f32 %v1217, 1e-06
          %v1220 = vadd.f32 %v1218, 1e-06
          %v1221 = vrsqrt.pop %v1219
          %v1222 = vmul.f32 %v1221, %v1219
          %v1223 = vmul.f32 %v1222, %v1221
          %v1224 = vmul.f32 0.5, %v1223
          %v1225 = vsub.f32 1.5, %v1224
          %v1226 = vmul.f32 %v1221, %v1225
          %vm1227 = vweird.f32 %v1219
          %vm1228 = vweird.f32 %v1221
          %vm1229 = vmor %vm1227, %vm1228
          %v1230 = vsel %vm1229, %v1221, %v1226
          %v1231 = vrsqrt.pop %v1220
          %v1232 = vmul.f32 %v1231, %v1220
          %v1233 = vmul.f32 %v1232, %v1231
          %v1234 = vmul.f32 0.5, %v1233
          %v1235 = vsub.f32 1.5, %v1234
          %v1236 = vmul.f32 %v1231, %v1235
          %vm1237 = vweird.f32 %v1220
          %vm1238 = vweird.f32 %v1231
          %vm1239 = vmor %vm1237, %vm1238
          %v1240 = vsel %vm1239, %v1231, %v1236
          %v1241 = vmul.f32 %v1200, %v1230
          %v1242 = vmul.f32 %v1201, %v1240
          %v1243 = vadd.f32 %v1208, 1.0
          %v1245 = vperm.slane %v1243, 0
          %v1247 = vmul.f32 %v1241, %v1245
          %v1248 = vmul.f32 %v1242, %v1245
          %1249 = vst.msk [vmem:[%s556] sm:$0xff] %vm637, %v1247
          %1250 = vst.msk [vmem:[%s556 + $0x8] sm:$0xff] %vm637, %v1248
        $region76: #{gemma_forward.1} parent=67 // pred_fallthru
          _
        %s1251 = sand.u32 %s353, 1
        %s1252 = scalar_lea.sflag [#allocation4], %s1251
        %s1253 = sand.u32 %s353, 1
        %s1254 = smul.addr %s1253, 16
        %s1255 = scalar_lea.vmem [#allocation3], %s1254
        // Predicated region
        $region77: #{gemma_forward.1} parent=67 // pred_check
          %p1256 = pneg %p363
        $region78: #{gemma_forward.1} parent=67 // pred_check_branch
          %1258 = sbr.rel (%p1256) target = $region80
        $region79: #{gemma_forward.1} parent=67 // pred_region
          %1260 = vsyncadd %s1252, 0
          %s1261 = smul.addr %s30, 2
          %s1262 = smul.addr %s1261, 8
          %s1263 = scalar_lea.hbm %s12, %s1262
          %s1264 = sshll.u32 %s1255, 4
          %s1265 = int_to_ptr.vmem [resolvable:$true] %s1264
          %s1266 = sshll.u32 %s1263, 4
          %s1267 = int_to_ptr.hbm [resolvable:$true] %s1266
          %1272 = dma.vmem_to_hbm [thread:$0]  %s1265, 256, %s1267, %s1252, 128, 128, 8
        $region80: #{gemma_forward.1} parent=67 // pred_fallthru
          _
      $region68: #{gemma_forward.1} parent=5 // pred_fallthru
        _
      %p1273 = scmp.le.s32.totalorder 2, %s21
      // Predicated region
      $region81: #{gemma_forward.1} parent=5 // pred_check
        %p1274 = pneg %p1273
      $region82: #{gemma_forward.1} parent=5 // pred_check_branch
        %1276 = sbr.rel (%p1274) target = $region84
      $region83: #{gemma_forward.1} parent=5 // pred_region
        %s1277 = ssub.s32 %s21, 2
        // Predicated region
        $region85: #{gemma_forward.1} parent=83 // pred_check
          %p1278 = pneg %p369
        $region86: #{gemma_forward.1} parent=83 // pred_check_branch
          %1280 = sbr.rel (%p1278) target = $region88
        $region87: #{gemma_forward.1} parent=83 // pred_region
          %s1281 = sand.u32 %s354, 1
          %s1282 = scalar_lea.sflag [#allocation4], %s1281
          %s1283 = sand.u32 %s354, 1
          %s1284 = smul.addr %s1283, 16
          %s1285 = scalar_lea.vmem [#allocation3], %s1284
          %1287 = dma.done %s1282, 256
        $region88: #{gemma_forward.1} parent=83 // pred_fallthru
          _
      $region84: #{gemma_forward.1} parent=5 // pred_fallthru
        _
    $region6: #{gemma_forward.1} parent=1 // loop_footer
      %s25 = sadd.s32 1, %s21
    $region7: #{gemma_forward.1} parent=1 // loop_footer_branch
      %20 = sbr.rel target = $region3
    $region8: #{gemma_forward.1} parent=1 // loop_exit
      _
    %1288 = vsyncpa [#allocation4], 1
    %s1289 = scalar_lea.sflag [#allocation4], 1
    %1290 = vsyncpa %s1289, 1

</llo_original>
